<compile_context>
chip_gen: v7x
topology: tpu7x:2x2x1
jax: 0.10.0
libtpu: 0.0.40
codegen_flags: <defaults>
</compile_context>

<pallas_src>
import functools
import math

import jax
import jax.numpy as jnp
from jax.experimental import pallas as pl
from jax.experimental.pallas import tpu as pltpu

F32 = jnp.float32


def _round_up(x, m):
    return (x + m - 1) // m * m


# ----------------------------------------------------------------------------
# Fused depthwise(atrous) + pointwise(1x1) kernel
# ----------------------------------------------------------------------------
def _fused_asc_kernel(x_ref, wdw_ref, bdw_ref, wpw_ref, bpw_ref, o_ref, *,
                      K, dil, stride, OH, OW):
    # x_ref   : (Hp, Wp, Cp)      f32   zero-padded input image, channels-last
    # wdw_ref : (K*K, Cp)         f32   depthwise weight, one row per tap
    # bdw_ref : (1, Cp)           f32   depthwise bias
    # wpw_ref : (Cp, Coutp)       bf16  pointwise weight
    # bpw_ref : (1, Coutp)        f32   pointwise bias
    # o_ref   : (OH, OW, Coutp)   f32
    Cp = x_ref.shape[-1]

    # --- depthwise dilated conv: accumulate K*K shifted taps on the VPU -----
    acc = jnp.zeros((OH, OW, Cp), jnp.float32)
    for kh in range(K):
        for kw in range(K):
            if stride == 1:
                hs = pl.ds(kh * dil, OH)
                ws = pl.ds(kw * dil, OW)
            else:
                hs = pl.ds(kh * dil, OH, stride)
                ws = pl.ds(kw * dil, OW, stride)
            tap = x_ref[hs, ws, :]                       # (OH, OW, Cp)
            w_tap = wdw_ref[pl.ds(kh * K + kw, 1), :]    # (1, Cp) broadcast
            acc = acc + tap * w_tap
    acc = acc + bdw_ref[...]                             # (1, Cp) broadcast

    # --- pointwise 1x1 conv: one MXU matmul, bf16 in / f32 accumulate -------
    dw = acc.reshape(OH * OW, Cp).astype(jnp.bfloat16)
    out = jnp.dot(dw, wpw_ref[...], preferred_element_type=jnp.float32)
    out = out + bpw_ref[...]                             # (1, Coutp) broadcast
    o_ref[...] = out.reshape(OH, OW, -1)


# ----------------------------------------------------------------------------
# Wrapper
# ----------------------------------------------------------------------------
def atrous_separable_conv(x_nchw, params, *, stride=1, padding=0, dilation=1):
    """Forward of AtrousSeparableConvolution. x is NCHW (PyTorch convention)."""
    wdw = params['dw_w']            # (Cin, 1, K, K)
    wpw = params['pw_w']            # (Cout, Cin, 1, 1)
    N, Cin, H, W = x_nchw.shape
    Cout = wpw.shape[0]
    K = wdw.shape[2]

    bdw = params['dw_b'] if params.get('dw_b') is not None \
        else jnp.zeros((Cin,), F32)     # bias=False: zero bias (tiny, 1xCp DMA)
    bpw = params['pw_b'] if params.get('pw_b') is not None \
        else jnp.zeros((Cout,), F32)

    Cp = _round_up(Cin, 128)
    Coutp = _round_up(Cout, 128)
    OH = (H + 2 * padding - dilation * (K - 1) - 1) // stride + 1
    OW = (W + 2 * padding - dilation * (K - 1) - 1) // stride + 1
    Hp, Wp = H + 2 * padding, W + 2 * padding

    # NHWC; fold the conv zero-padding and the lane-alignment channel padding
    # into one jnp.pad (single extra pass, done once).
    x_nhwc = x_nchw.astype(F32).transpose(0, 2, 3, 1)
    x_p = jnp.pad(x_nhwc, ((0, 0), (padding, padding),
                           (padding, padding), (0, Cp - Cin)))

    # Weights / biases padded once (tiny).
    wdw_m = jnp.pad(wdw.reshape(Cin, K * K).T.astype(F32),
                    ((0, 0), (0, Cp - Cin)))                       # (K*K, Cp)
    bdw_m = jnp.pad(bdw.reshape(1, Cin).astype(F32),
                    ((0, 0), (0, Cp - Cin)))                       # (1, Cp)
    wpw_m = jnp.pad(wpw.reshape(Cout, Cin).T.astype(F32),
                    ((0, Cp - Cin), (0, Coutp - Cout))
                    ).astype(jnp.bfloat16)                         # (Cp, Coutp)
    bpw_m = jnp.pad(bpw.reshape(1, Cout).astype(F32),
                    ((0, 0), (0, Coutp - Cout)))                   # (1, Coutp)

    kernel = functools.partial(_fused_asc_kernel, K=K, dil=dilation,
                               stride=stride, OH=OH, OW=OW)
    out = pl.pallas_call(
        kernel,
        out_shape=jax.ShapeDtypeStruct((N, OH, OW, Coutp), F32),
        grid=(N,),
        in_specs=[
            pl.BlockSpec((None, Hp, Wp, Cp), lambda n: (n, 0, 0, 0)),
            pl.BlockSpec((K * K, Cp), lambda n: (0, 0)),
            pl.BlockSpec((1, Cp), lambda n: (0, 0)),
            pl.BlockSpec((Cp, Coutp), lambda n: (0, 0)),
            pl.BlockSpec((1, Coutp), lambda n: (0, 0)),
        ],
        out_specs=pl.BlockSpec((None, OH, OW, Coutp), lambda n: (n, 0, 0, 0)),
        compiler_params=pltpu.CompilerParams(
            dimension_semantics=("parallel",),
            vmem_limit_bytes=32 * 1024 * 1024),
    )(x_p, wdw_m, bdw_m, wpw_m, bpw_m)

    # strip channel padding, back to NCHW
    return out[:, :, :, :Cout].transpose(0, 3, 1, 2)


# ----------------------------------------------------------------------------
# Pure-JAX reference (f32, HIGHEST precision) for self-check
# ----------------------------------------------------------------------------
def reference_asc(x, params, stride, padding, dilation):
    cin = x.shape[1]
    y = jax.lax.conv_general_dilated(
        x, params['dw_w'],
        window_strides=(stride, stride),
        padding=((padding, padding), (padding, padding)),
        rhs_dilation=(dilation, dilation),
        dimension_numbers=('NCHW', 'OIHW', 'NCHW'),
        feature_group_count=cin,
        precision=jax.lax.Precision.HIGHEST)
    if params.get('dw_b') is not None:
        y = y + params['dw_b'].reshape(1, -1, 1, 1)
    z = jax.lax.conv_general_dilated(
        y, params['pw_w'],
        window_strides=(1, 1), padding='VALID',
        dimension_numbers=('NCHW', 'OIHW', 'NCHW'),
        precision=jax.lax.Precision.HIGHEST)
    if params.get('pw_b') is not None:
        z = z + params['pw_b'].reshape(1, -1, 1, 1)
    return z


# ----------------------------------------------------------------------------
# Parameter init (matches the module's _init_weight: kaiming_normal_ on convs)
# ----------------------------------------------------------------------------
def init_params(key, cin, cout, k, bias=True):
    k1, k2, k3, k4 = jax.random.split(key, 4)
    # kaiming_normal_ (fan_in, gain sqrt(2)); depthwise fan_in = 1*k*k
    dw_w = jax.random.normal(k1, (cin, 1, k, k), F32) * math.sqrt(2.0 / (k * k))
    pw_w = jax.random.normal(k2, (cout, cin, 1, 1), F32) * math.sqrt(2.0 / cin)
    if bias:
        # PyTorch Conv2d default bias init: U(-1/sqrt(fan_in), 1/sqrt(fan_in))
        dw_b = jax.random.uniform(k3, (cin,), F32, -1.0, 1.0) / math.sqrt(k * k)
        pw_b = jax.random.uniform(k4, (cout,), F32, -1.0, 1.0) / math.sqrt(cin)
    else:
        dw_b = pw_b = None
    return {'dw_w': dw_w, 'dw_b': dw_b, 'pw_w': pw_w, 'pw_b': pw_b}


if __name__ == "__main__":
    key = jax.random.PRNGKey(0)

    # Small shapes: batch=2, in_channels=32, out_channels=64, 16x16 spatial,
    # kernel 3, stride 1, atrous dilation 2 with padding 2 (keeps spatial size).
    N, Cin, H, W = 2, 32, 16, 16
    Cout, K = 64, 3
    stride, padding, dilation = 1, 2, 2

    params = init_params(jax.random.fold_in(key, 1), Cin, Cout, K, bias=True)
    x = jax.random.normal(jax.random.fold_in(key, 2), (N, Cin, H, W), F32)

    fwd = jax.jit(functools.partial(atrous_separable_conv, stride=stride,
                                    padding=padding, dilation=dilation))
    y = jax.block_until_ready(fwd(x, params))
    assert y.shape == (N, Cout, H, W), y.shape

    # Self-check against an f32 reference (loose tolerance: bf16 MXU operands).
    ref = jax.block_until_ready(reference_asc(x, params, stride, padding, dilation))
    err = float(jnp.max(jnp.abs(y - ref)))
    scale = float(jnp.max(jnp.abs(ref)))
    assert err <= 0.05 * scale + 0.2, f"mismatch: max_err={err}, ref_scale={scale}"

    print("KERNEL_OK")
</pallas_src>

<mosaic_0001>
module attributes {stable_mosaic.version = 11 : i64} {
  func.func @_fused_asc_kernel(%arg0: i32, %arg1: memref<1x20x20x128xf32, #tpu.memory_space<vmem>>, %arg2: memref<9x128xf32, #tpu.memory_space<vmem>>, %arg3: memref<1x128xf32, #tpu.memory_space<vmem>>, %arg4: memref<128x128xbf16, #tpu.memory_space<vmem>>, %arg5: memref<1x128xf32, #tpu.memory_space<vmem>>, %arg6: memref<1x16x16x128xf32, #tpu.memory_space<vmem>>) attributes {dimension_semantics = [#tpu.dimension_semantics<parallel>], iteration_bounds = array<i64: 2>, scalar_prefetch = 0 : i64, scratch_operands = 0 : i64, tpu.core_type = #tpu.core_type<tc>, window_params = [{transform_indices = @transform_0, window_bounds = array<i64: 1, 20, 20, 128>}, {pipeline_mode = #tpu.pipeline_mode<synchronous>, transform_indices = @transform_1, window_bounds = array<i64: 9, 128>}, {pipeline_mode = #tpu.pipeline_mode<synchronous>, transform_indices = @transform_2, window_bounds = array<i64: 1, 128>}, {pipeline_mode = #tpu.pipeline_mode<synchronous>, transform_indices = @transform_3, window_bounds = array<i64: 128, 128>}, {pipeline_mode = #tpu.pipeline_mode<synchronous>, transform_indices = @transform_4, window_bounds = array<i64: 1, 128>}, {transform_indices = @transform_5, window_bounds = array<i64: 1, 16, 16, 128>}]} {
    %cst = arith.constant 0.000000e+00 : f32
    %0 = vector.broadcast %cst : f32 to vector<16x16x128xf32>
    %c0 = arith.constant 0 : index
    %c0_0 = arith.constant 0 : index
    %c0_1 = arith.constant 0 : index
    %c0_2 = arith.constant 0 : index
    %1 = vector.load %arg1[%c0, %c0_0, %c0_1, %c0_2] : memref<1x20x20x128xf32, #tpu.memory_space<vmem>>, vector<1x16x16x128xf32>
    %2 = vector.shape_cast %1 : vector<1x16x16x128xf32> to vector<16x16x128xf32>
    %c0_3 = arith.constant 0 : index
    %c0_4 = arith.constant 0 : index
    %3 = vector.load %arg2[%c0_3, %c0_4] : memref<9x128xf32, #tpu.memory_space<vmem>>, vector<1x128xf32>
    %4 = vector.shape_cast %3 : vector<1x128xf32> to vector<1x1x128xf32>
    %5 = vector.broadcast %4 : vector<1x1x128xf32> to vector<16x16x128xf32>
    %6 = arith.mulf %2, %5 : vector<16x16x128xf32>
    %7 = arith.addf %0, %6 : vector<16x16x128xf32>
    %c0_5 = arith.constant 0 : index
    %c0_6 = arith.constant 0 : index
    %c2 = arith.constant 2 : index
    %c0_7 = arith.constant 0 : index
    %8 = vector.load %arg1[%c0_5, %c0_6, %c2, %c0_7] : memref<1x20x20x128xf32, #tpu.memory_space<vmem>>, vector<1x16x16x128xf32>
    %9 = vector.shape_cast %8 : vector<1x16x16x128xf32> to vector<16x16x128xf32>
    %c1 = arith.constant 1 : index
    %c0_8 = arith.constant 0 : index
    %10 = vector.load %arg2[%c1, %c0_8] : memref<9x128xf32, #tpu.memory_space<vmem>>, vector<1x128xf32>
    %11 = vector.shape_cast %10 : vector<1x128xf32> to vector<1x1x128xf32>
    %12 = vector.broadcast %11 : vector<1x1x128xf32> to vector<16x16x128xf32>
    %13 = arith.mulf %9, %12 : vector<16x16x128xf32>
    %14 = arith.addf %7, %13 : vector<16x16x128xf32>
    %c0_9 = arith.constant 0 : index
    %c0_10 = arith.constant 0 : index
    %c4 = arith.constant 4 : index
    %c0_11 = arith.constant 0 : index
    %15 = vector.load %arg1[%c0_9, %c0_10, %c4, %c0_11] : memref<1x20x20x128xf32, #tpu.memory_space<vmem>>, vector<1x16x16x128xf32>
    %16 = vector.shape_cast %15 : vector<1x16x16x128xf32> to vector<16x16x128xf32>
    %c2_12 = arith.constant 2 : index
    %c0_13 = arith.constant 0 : index
    %17 = vector.load %arg2[%c2_12, %c0_13] : memref<9x128xf32, #tpu.memory_space<vmem>>, vector<1x128xf32>
    %18 = vector.shape_cast %17 : vector<1x128xf32> to vector<1x1x128xf32>
    %19 = vector.broadcast %18 : vector<1x1x128xf32> to vector<16x16x128xf32>
    %20 = arith.mulf %16, %19 : vector<16x16x128xf32>
    %21 = arith.addf %14, %20 : vector<16x16x128xf32>
    %c0_14 = arith.constant 0 : index
    %c2_15 = arith.constant 2 : index
    %c0_16 = arith.constant 0 : index
    %c0_17 = arith.constant 0 : index
    %22 = vector.load %arg1[%c0_14, %c2_15, %c0_16, %c0_17] : memref<1x20x20x128xf32, #tpu.memory_space<vmem>>, vector<1x16x16x128xf32>
    %23 = vector.shape_cast %22 : vector<1x16x16x128xf32> to vector<16x16x128xf32>
    %c3 = arith.constant 3 : index
    %c0_18 = arith.constant 0 : index
    %24 = vector.load %arg2[%c3, %c0_18] : memref<9x128xf32, #tpu.memory_space<vmem>>, vector<1x128xf32>
    %25 = vector.shape_cast %24 : vector<1x128xf32> to vector<1x1x128xf32>
    %26 = vector.broadcast %25 : vector<1x1x128xf32> to vector<16x16x128xf32>
    %27 = arith.mulf %23, %26 : vector<16x16x128xf32>
    %28 = arith.addf %21, %27 : vector<16x16x128xf32>
    %c0_19 = arith.constant 0 : index
    %c2_20 = arith.constant 2 : index
    %c2_21 = arith.constant 2 : index
    %c0_22 = arith.constant 0 : index
    %29 = vector.load %arg1[%c0_19, %c2_20, %c2_21, %c0_22] : memref<1x20x20x128xf32, #tpu.memory_space<vmem>>, vector<1x16x16x128xf32>
    %30 = vector.shape_cast %29 : vector<1x16x16x128xf32> to vector<16x16x128xf32>
    %c4_23 = arith.constant 4 : index
    %c0_24 = arith.constant 0 : index
    %31 = vector.load %arg2[%c4_23, %c0_24] : memref<9x128xf32, #tpu.memory_space<vmem>>, vector<1x128xf32>
    %32 = vector.shape_cast %31 : vector<1x128xf32> to vector<1x1x128xf32>
    %33 = vector.broadcast %32 : vector<1x1x128xf32> to vector<16x16x128xf32>
    %34 = arith.mulf %30, %33 : vector<16x16x128xf32>
    %35 = arith.addf %28, %34 : vector<16x16x128xf32>
    %c0_25 = arith.constant 0 : index
    %c2_26 = arith.constant 2 : index
    %c4_27 = arith.constant 4 : index
    %c0_28 = arith.constant 0 : index
    %36 = vector.load %arg1[%c0_25, %c2_26, %c4_27, %c0_28] : memref<1x20x20x128xf32, #tpu.memory_space<vmem>>, vector<1x16x16x128xf32>
    %37 = vector.shape_cast %36 : vector<1x16x16x128xf32> to vector<16x16x128xf32>
    %c5 = arith.constant 5 : index
    %c0_29 = arith.constant 0 : index
    %38 = vector.load %arg2[%c5, %c0_29] : memref<9x128xf32, #tpu.memory_space<vmem>>, vector<1x128xf32>
    %39 = vector.shape_cast %38 : vector<1x128xf32> to vector<1x1x128xf32>
    %40 = vector.broadcast %39 : vector<1x1x128xf32> to vector<16x16x128xf32>
    %41 = arith.mulf %37, %40 : vector<16x16x128xf32>
    %42 = arith.addf %35, %41 : vector<16x16x128xf32>
    %c0_30 = arith.constant 0 : index
    %c4_31 = arith.constant 4 : index
    %c0_32 = arith.constant 0 : index
    %c0_33 = arith.constant 0 : index
    %43 = vector.load %arg1[%c0_30, %c4_31, %c0_32, %c0_33] : memref<1x20x20x128xf32, #tpu.memory_space<vmem>>, vector<1x16x16x128xf32>
    %44 = vector.shape_cast %43 : vector<1x16x16x128xf32> to vector<16x16x128xf32>
    %c6 = arith.constant 6 : index
    %c0_34 = arith.constant 0 : index
    %45 = vector.load %arg2[%c6, %c0_34] : memref<9x128xf32, #tpu.memory_space<vmem>>, vector<1x128xf32>
    %46 = vector.shape_cast %45 : vector<1x128xf32> to vector<1x1x128xf32>
    %47 = vector.broadcast %46 : vector<1x1x128xf32> to vector<16x16x128xf32>
    %48 = arith.mulf %44, %47 : vector<16x16x128xf32>
    %49 = arith.addf %42, %48 : vector<16x16x128xf32>
    %c0_35 = arith.constant 0 : index
    %c4_36 = arith.constant 4 : index
    %c2_37 = arith.constant 2 : index
    %c0_38 = arith.constant 0 : index
    %50 = vector.load %arg1[%c0_35, %c4_36, %c2_37, %c0_38] : memref<1x20x20x128xf32, #tpu.memory_space<vmem>>, vector<1x16x16x128xf32>
    %51 = vector.shape_cast %50 : vector<1x16x16x128xf32> to vector<16x16x128xf32>
    %c7 = arith.constant 7 : index
    %c0_39 = arith.constant 0 : index
    %52 = vector.load %arg2[%c7, %c0_39] : memref<9x128xf32, #tpu.memory_space<vmem>>, vector<1x128xf32>
    %53 = vector.shape_cast %52 : vector<1x128xf32> to vector<1x1x128xf32>
    %54 = vector.broadcast %53 : vector<1x1x128xf32> to vector<16x16x128xf32>
    %55 = arith.mulf %51, %54 : vector<16x16x128xf32>
    %56 = arith.addf %49, %55 : vector<16x16x128xf32>
    %c0_40 = arith.constant 0 : index
    %c4_41 = arith.constant 4 : index
    %c4_42 = arith.constant 4 : index
    %c0_43 = arith.constant 0 : index
    %57 = vector.load %arg1[%c0_40, %c4_41, %c4_42, %c0_43] : memref<1x20x20x128xf32, #tpu.memory_space<vmem>>, vector<1x16x16x128xf32>
    %58 = vector.shape_cast %57 : vector<1x16x16x128xf32> to vector<16x16x128xf32>
    %c8 = arith.constant 8 : index
    %c0_44 = arith.constant 0 : index
    %59 = vector.load %arg2[%c8, %c0_44] : memref<9x128xf32, #tpu.memory_space<vmem>>, vector<1x128xf32>
    %60 = vector.shape_cast %59 : vector<1x128xf32> to vector<1x1x128xf32>
    %61 = vector.broadcast %60 : vector<1x1x128xf32> to vector<16x16x128xf32>
    %62 = arith.mulf %58, %61 : vector<16x16x128xf32>
    %63 = arith.addf %56, %62 : vector<16x16x128xf32>
    %c0_45 = arith.constant 0 : index
    %c0_46 = arith.constant 0 : index
    %64 = vector.load %arg3[%c0_45, %c0_46] : memref<1x128xf32, #tpu.memory_space<vmem>>, vector<1x128xf32>
    %65 = vector.shape_cast %64 : vector<1x128xf32> to vector<1x1x128xf32>
    %66 = vector.broadcast %65 : vector<1x1x128xf32> to vector<16x16x128xf32>
    %67 = arith.addf %63, %66 : vector<16x16x128xf32>
    %68 = vector.shape_cast %67 : vector<16x16x128xf32> to vector<256x128xf32>
    %69 = arith.truncf %68 : vector<256x128xf32> to vector<256x128xbf16>
    %c0_47 = arith.constant 0 : index
    %c0_48 = arith.constant 0 : index
    %70 = vector.load %arg4[%c0_47, %c0_48] : memref<128x128xbf16, #tpu.memory_space<vmem>>, vector<128x128xbf16>
    %cst_49 = arith.constant dense<0.000000e+00> : vector<256x128xf32>
    %71 = tpu.matmul %69, %70, %cst_49 {dimension_numbers = #tpu.dot_dimension_numbers<[1], [0], [0], [1], [0, 0, 1, 1], [], []>} : vector<256x128xbf16>, vector<128x128xbf16>, vector<256x128xf32> -> vector<256x128xf32>
    %c0_50 = arith.constant 0 : index
    %c0_51 = arith.constant 0 : index
    %72 = vector.load %arg5[%c0_50, %c0_51] : memref<1x128xf32, #tpu.memory_space<vmem>>, vector<1x128xf32>
    %73 = vector.broadcast %72 : vector<1x128xf32> to vector<256x128xf32>
    %74 = arith.addf %71, %73 : vector<256x128xf32>
    %75 = vector.shape_cast %74 : vector<256x128xf32> to vector<16x16x128xf32>
    %c0_52 = arith.constant 0 : index
    %c0_53 = arith.constant 0 : index
    %c0_54 = arith.constant 0 : index
    %c0_55 = arith.constant 0 : index
    %76 = vector.load %arg6[%c0_52, %c0_53, %c0_54, %c0_55] : memref<1x16x16x128xf32, #tpu.memory_space<vmem>>, vector<1x16x16x128xf32>
    %77 = vector.shape_cast %76 : vector<1x16x16x128xf32> to vector<16x16x128xf32>
    %78 = vector.shape_cast %75 : vector<16x16x128xf32> to vector<1x16x16x128xf32>
    tpu.vector_store %arg6[%c0_52, %c0_53, %c0_54, %c0_55], %78 {strides = array<i32>} : memref<1x16x16x128xf32, #tpu.memory_space<vmem>>, vector<1x16x16x128xf32>,
    return
  }
  func.func @transform_0(%arg0: i32) -> (i32, i32, i32, i32) {
    %c0_i32 = arith.constant 0 : i32
    %c0_i32_0 = arith.constant 0 : i32
    %c0_i32_1 = arith.constant 0 : i32
    %c0_i32_2 = arith.constant 0 : i32
    return %arg0, %c0_i32, %c0_i32_0, %c0_i32_1 : i32, i32, i32, i32
  }
  func.func @transform_1(%arg0: i32) -> (i32, i32) {
    %c0_i32 = arith.constant 0 : i32
    %c0_i32_0 = arith.constant 0 : i32
    %c0_i32_1 = arith.constant 0 : i32
    return %c0_i32, %c0_i32_0 : i32, i32
  }
  func.func @transform_2(%arg0: i32) -> (i32, i32) {
    %c0_i32 = arith.constant 0 : i32
    %c0_i32_0 = arith.constant 0 : i32
    %c0_i32_1 = arith.constant 0 : i32
    return %c0_i32, %c0_i32_0 : i32, i32
  }
  func.func @transform_3(%arg0: i32) -> (i32, i32) {
    %c0_i32 = arith.constant 0 : i32
    %c0_i32_0 = arith.constant 0 : i32
    %c0_i32_1 = arith.constant 0 : i32
    return %c0_i32, %c0_i32_0 : i32, i32
  }
  func.func @transform_4(%arg0: i32) -> (i32, i32) {
    %c0_i32 = arith.constant 0 : i32
    %c0_i32_0 = arith.constant 0 : i32
    %c0_i32_1 = arith.constant 0 : i32
    return %c0_i32, %c0_i32_0 : i32, i32
  }
  func.func @transform_5(%arg0: i32) -> (i32, i32, i32, i32) {
    %c0_i32 = arith.constant 0 : i32
    %c0_i32_0 = arith.constant 0 : i32
    %c0_i32_1 = arith.constant 0 : i32
    %c0_i32_2 = arith.constant 0 : i32
    return %arg0, %c0_i32, %c0_i32_0, %c0_i32_1 : i32, i32, i32, i32
  }
}

</mosaic_0001>

<llo_original>
// kernel: atrous_separable_conv.1
$region0: #{atrous_separable_conv.1}
  #allocation0 [shape = 'u32[]', space=smem, size = 0x4, offset = 0x4, fixed_abs, tag = 'smem constant byte address 0x4 - core index']
  #allocation1 [shape = 'u32[144,128]{1,0:T(1,128)}', space=vmem, size = 0x12000, scoped, tag = 'internal scratch']
  %s0 = inlined_call_operand.vmem [shape: f32[2,20,20,128], index: 0, kind: input, shape index: {}]
  %s1 = inlined_call_operand.vmem [shape: f32[9,128], index: 1, kind: input, shape index: {}]
  %s2 = inlined_call_operand.vmem [shape: f32[1,128], index: 2, kind: input, shape index: {}]
  %s3 = inlined_call_operand.vmem [shape: bf16[128,128], index: 3, kind: input, shape index: {}]
  %s4 = inlined_call_operand.vmem [shape: f32[1,128], index: 4, kind: input, shape index: {}]
  %s5 = inlined_call_operand.vmem [shape: f32[2,16,16,128], index: 5, kind: output, shape index: {}]
  %s6 = sld [smem:[#allocation0]]
  $region53: #{atrous_separable_conv.1} parent=0
    _
  %s8 = ssub.s32 1, %s6
  %s9 = scalar_select 0, %s8, %s6
  loop: start=0, step=1, limit=4
  $region2: #{atrous_separable_conv.1} parent=0 // loop_pre_header
    _
  $region3: #{atrous_separable_conv.1} parent=0 // loop_header
    %s11 = sphi 0, %s15
    %p12 = scmp.ge.s32.totalorder %s11, 4
    %s21 = sphi 0, %s23
    %s24 = sphi 0, %s21
    %s25 = sphi 0, %s24
    %s41 = sphi 0, %s25
    %s45 = sphi 0, %s45
    %s47 = sphi 0, %s45
    %s48 = sphi 0, %s47
    %s62 = sphi 0, %s48
    %s66 = sphi 0, %s66
    %s68 = sphi 0, %s66
    %s69 = sphi 0, %s68
    %s83 = sphi 0, %s69
    %s87 = sphi 0, %s87
    %s89 = sphi 0, %s87
    %s90 = sphi 0, %s89
    %s104 = sphi 0, %s90
    %s108 = sphi 0, %s108
    %s110 = sphi 0, %s108
    %s111 = sphi 0, %s110
    %s125 = sphi 0, %s111
    %s131 = sphi 0, %s133
    %s134 = sphi 0, %s131
    %s135 = sphi 0, %s134
    %s151 = sphi 0, %s135
  $region4: #{atrous_separable_conv.1} parent=0 // loop_header_branch
    %14 = sbr.rel (%p12) target = $region8
  $region5: #{atrous_separable_conv.1} parent=0 // loop_body
    %s16 = ssub.s32 %s11, 1
    %s17 = ssub.s32 %s11, 2
    %s18 = sadd.s32 %s11, 1
    %s19 = ssub.s32 %s11, %s18
    %p20 = scmp.eq.s32.totalorder %s19, 0
    %s22 = sadd.s32 %s21, 1
    %s23 = scalar_select %p20, %s21, %s22
    %p26 = pneg %p20
    %p27 = scmp.eq.s32.totalorder %s11, 1
    %p28 = por %p26, %p27
    %p29 = scmp.ne.s32.totalorder %s21, %s24
    %p30 = scmp.eq.s32.totalorder %s11, 0
    %p31 = por %p29, %p30
    %p32 = scmp.ne.s32.totalorder %s21, %s24
    %p33 = scmp.eq.s32.totalorder %s16, 1
    %p34 = por %p32, %p33
    %p35 = scmp.ne.s32.totalorder %s24, %s25
    %p36 = scmp.eq.s32.totalorder %s16, 0
    %p37 = por %p35, %p36
    %p38 = scmp.ne.s32.totalorder %s24, %s25
    %p39 = scmp.eq.s32.totalorder %s17, 1
    %p40 = por %p38, %p39
    %p42 = scmp.ne.s32.totalorder %s25, %s41
    %p43 = scmp.eq.s32.totalorder %s17, 0
    %p44 = por %p42, %p43
    %s46 = sadd.s32 %s45, 1
    %p49 = scmp.eq.s32.totalorder %s11, 1
    %p50 = scmp.ne.s32.totalorder %s45, %s47
    %p51 = scmp.eq.s32.totalorder %s11, 0
    %p52 = por %p50, %p51
    %p53 = scmp.ne.s32.totalorder %s45, %s47
    %p54 = scmp.eq.s32.totalorder %s16, 1
    %p55 = por %p53, %p54
    %p56 = scmp.ne.s32.totalorder %s47, %s48
    %p57 = scmp.eq.s32.totalorder %s16, 0
    %p58 = por %p56, %p57
    %p59 = scmp.ne.s32.totalorder %s47, %s48
    %p60 = scmp.eq.s32.totalorder %s17, 1
    %p61 = por %p59, %p60
    %p63 = scmp.ne.s32.totalorder %s48, %s62
    %p64 = scmp.eq.s32.totalorder %s17, 0
    %p65 = por %p63, %p64
    %s67 = sadd.s32 %s66, 1
    %p70 = scmp.eq.s32.totalorder %s11, 1
    %p71 = scmp.ne.s32.totalorder %s66, %s68
    %p72 = scmp.eq.s32.totalorder %s11, 0
    %p73 = por %p71, %p72
    %p74 = scmp.ne.s32.totalorder %s66, %s68
    %p75 = scmp.eq.s32.totalorder %s16, 1
    %p76 = por %p74, %p75
    %p77 = scmp.ne.s32.totalorder %s68, %s69
    %p78 = scmp.eq.s32.totalorder %s16, 0
    %p79 = por %p77, %p78
    %p80 = scmp.ne.s32.totalorder %s68, %s69
    %p81 = scmp.eq.s32.totalorder %s17, 1
    %p82 = por %p80, %p81
    %p84 = scmp.ne.s32.totalorder %s69, %s83
    %p85 = scmp.eq.s32.totalorder %s17, 0
    %p86 = por %p84, %p85
    %s88 = sadd.s32 %s87, 1
    %p91 = scmp.eq.s32.totalorder %s11, 1
    %p92 = scmp.ne.s32.totalorder %s87, %s89
    %p93 = scmp.eq.s32.totalorder %s11, 0
    %p94 = por %p92, %p93
    %p95 = scmp.ne.s32.totalorder %s87, %s89
    %p96 = scmp.eq.s32.totalorder %s16, 1
    %p97 = por %p95, %p96
    %p98 = scmp.ne.s32.totalorder %s89, %s90
    %p99 = scmp.eq.s32.totalorder %s16, 0
    %p100 = por %p98, %p99
    %p101 = scmp.ne.s32.totalorder %s89, %s90
    %p102 = scmp.eq.s32.totalorder %s17, 1
    %p103 = por %p101, %p102
    %p105 = scmp.ne.s32.totalorder %s90, %s104
    %p106 = scmp.eq.s32.totalorder %s17, 0
    %p107 = por %p105, %p106
    %s109 = sadd.s32 %s108, 1
    %p112 = scmp.eq.s32.totalorder %s11, 1
    %p113 = scmp.ne.s32.totalorder %s108, %s110
    %p114 = scmp.eq.s32.totalorder %s11, 0
    %p115 = por %p113, %p114
    %p116 = scmp.ne.s32.totalorder %s108, %s110
    %p117 = scmp.eq.s32.totalorder %s16, 1
    %p118 = por %p116, %p117
    %p119 = scmp.ne.s32.totalorder %s110, %s111
    %p120 = scmp.eq.s32.totalorder %s16, 0
    %p121 = por %p119, %p120
    %p122 = scmp.ne.s32.totalorder %s110, %s111
    %p123 = scmp.eq.s32.totalorder %s17, 1
    %p124 = por %p122, %p123
    %p126 = scmp.ne.s32.totalorder %s111, %s125
    %p127 = scmp.eq.s32.totalorder %s17, 0
    %p128 = por %p126, %p127
    %s129 = ssub.s32 %s11, %s18
    %p130 = scmp.eq.s32.totalorder %s129, 0
    %s132 = sadd.s32 %s131, 1
    %s133 = scalar_select %p130, %s131, %s132
    %p136 = pneg %p130
    %p137 = scmp.eq.s32.totalorder %s11, 1
    %p138 = por %p136, %p137
    %p139 = scmp.ne.s32.totalorder %s131, %s134
    %p140 = scmp.eq.s32.totalorder %s11, 0
    %p141 = por %p139, %p140
    %p142 = scmp.ne.s32.totalorder %s131, %s134
    %p143 = scmp.eq.s32.totalorder %s16, 1
    %p144 = por %p142, %p143
    %p145 = scmp.ne.s32.totalorder %s134, %s135
    %p146 = scmp.eq.s32.totalorder %s16, 0
    %p147 = por %p145, %p146
    %p148 = scmp.ne.s32.totalorder %s134, %s135
    %p149 = scmp.eq.s32.totalorder %s17, 1
    %p150 = por %p148, %p149
    %p152 = scmp.ne.s32.totalorder %s135, %s151
    %p153 = scmp.eq.s32.totalorder %s17, 0
    %p154 = por %p152, %p153
    %p155 = scmp.le.s32.totalorder 1, %s11
    %p156 = scmp.lt.s32.totalorder %s11, 3
    %p157 = pnand %p155, %p156
    %p158 = pneg %p157
    // Predicated region
    $region9: #{atrous_separable_conv.1} parent=5 // pred_check
      _
    $region10: #{atrous_separable_conv.1} parent=5 // pred_check_branch
      %160 = sbr.rel (%p157) target = $region12
    $region11: #{atrous_separable_conv.1} parent=5 // pred_region
      %s161 = ssub.s32 %s11, 1
      // Predicated region
      $region13: #{atrous_separable_conv.1} parent=11 // pred_check
        %p162 = pneg %p58
      $region14: #{atrous_separable_conv.1} parent=11 // pred_check_branch
        %164 = sbr.rel (%p162) target = $region16
      $region15: #{atrous_separable_conv.1} parent=11 // pred_region
        _
      $region16: #{atrous_separable_conv.1} parent=11 // pred_fallthru
        _
      // Predicated region
      $region17: #{atrous_separable_conv.1} parent=11 // pred_check
        %p165 = pneg %p79
      $region18: #{atrous_separable_conv.1} parent=11 // pred_check_branch
        %167 = sbr.rel (%p165) target = $region20
      $region19: #{atrous_separable_conv.1} parent=11 // pred_region
        _
      $region20: #{atrous_separable_conv.1} parent=11 // pred_fallthru
        _
      // Predicated region
      $region21: #{atrous_separable_conv.1} parent=11 // pred_check
        %p168 = pneg %p100
      $region22: #{atrous_separable_conv.1} parent=11 // pred_check_branch
        %170 = sbr.rel (%p168) target = $region24
      $region23: #{atrous_separable_conv.1} parent=11 // pred_region
        _
      $region24: #{atrous_separable_conv.1} parent=11 // pred_fallthru
        _
      // Predicated region
      $region25: #{atrous_separable_conv.1} parent=11 // pred_check
        %p171 = pneg %p121
      $region26: #{atrous_separable_conv.1} parent=11 // pred_check_branch
        %173 = sbr.rel (%p171) target = $region28
      $region27: #{atrous_separable_conv.1} parent=11 // pred_region
        _
      $region28: #{atrous_separable_conv.1} parent=11 // pred_fallthru
        _
    $region12: #{atrous_separable_conv.1} parent=5 // pred_fallthru
      _
    %p174 = scmp.lt.s32.totalorder %s11, 2
    // Predicated region
    $region29: #{atrous_separable_conv.1} parent=5 // pred_check
      %p175 = pneg %p174
    $region30: #{atrous_separable_conv.1} parent=5 // pred_check_branch
      %177 = sbr.rel (%p175) target = $region32
    $region31: #{atrous_separable_conv.1} parent=5 // pred_region
      // Predicated region
      $region33: #{atrous_separable_conv.1} parent=31 // pred_check
        %p178 = pneg %p31
      $region34: #{atrous_separable_conv.1} parent=31 // pred_check_branch
        %180 = sbr.rel (%p178) target = $region36
      $region35: #{atrous_separable_conv.1} parent=31 // pred_region
        %p181 = scmp.lt.s32.totalorder %s11, 1
        %s182 = scalar_select %p181, %s11, 1
        %s183 = smul.addr %s182, 60
        %s184 = smul.addr %s183, 8
        %s185 = scalar_lea.vmem %s0, %s184
      $region36: #{atrous_separable_conv.1} parent=31 // pred_fallthru
        _
    $region32: #{atrous_separable_conv.1} parent=5 // pred_fallthru
      _
    %p186 = scmp.le.s32.totalorder 1, %s11
    %p187 = scmp.lt.s32.totalorder %s11, 3
    %p188 = pnand %p186, %p187
    %p189 = pneg %p188
    // Predicated region
    $region37: #{atrous_separable_conv.1} parent=5 // pred_check
      _
    $region38: #{atrous_separable_conv.1} parent=5 // pred_check_branch
      %191 = sbr.rel (%p188) target = $region40
    $region39: #{atrous_separable_conv.1} parent=5 // pred_region
      %s192 = ssub.s32 %s11, 1
      %p193 = scmp.lt.s32.totalorder %s16, 1
      %s194 = scalar_select %p193, %s16, 1
      %s195 = smul.addr %s194, 60
      %s196 = smul.addr %s195, 8
      %s197 = scalar_lea.vmem %s0, %s196
      %p198 = pneg %p37
      %p199 = pneg %p34
      %p200 = pneg %p58
      %p201 = pneg %p55
      %p202 = pneg %p79
      %p203 = pneg %p76
      %p204 = pneg %p100
      %p205 = pneg %p97
      %p206 = pneg %p121
      %p207 = pneg %p118
      %p208 = pneg %p147
      %p209 = pneg %p144
      %p210 = scmp.lt.s32.totalorder %s16, 1
      %s211 = scalar_select %p210, %s16, 1
      %s212 = smul.addr %s211, 32
      %s213 = smul.addr %s212, 8
      %s214 = scalar_lea.vmem %s5, %s213
      %p215 = scmp.lt.s32.totalorder %s16, 1
      %s216 = scalar_select %p215, %s16, 1
      %s217 = smul.addr %s216, 60
      %s218 = smul.addr %s217, 8
      %s219 = scalar_lea.vmem %s0, %s218
      %p220 = scmp.lt.s32.totalorder %s16, 1
      %s221 = scalar_select %p220, %s16, 1
      %s222 = smul.addr %s221, 32
      %s223 = smul.addr %s222, 8
      %s224 = scalar_lea.vmem %s5, %s223
      %v226 = vld [vmem:[%s219] sm:$0xff]
      %v227 = vld [vmem:[%s219 + $0x8] sm:$0xff]
      %v228 = vld [vmem:[%s219 + $0x18] sm:$0xff]
      %v229 = vld [vmem:[%s219 + $0x20] sm:$0xff]
      %v230 = vld [vmem:[%s219 + $0x30] sm:$0xff]
      %v231 = vld [vmem:[%s219 + $0x38] sm:$0xff]
      %v232 = vld [vmem:[%s219 + $0x48] sm:$0xff]
      %v233 = vld [vmem:[%s219 + $0x50] sm:$0xff]
      %v234 = vld [vmem:[%s219 + $0x60] sm:$0xff]
      %v235 = vld [vmem:[%s219 + $0x68] sm:$0xff]
      %v236 = vld [vmem:[%s219 + $0x78] sm:$0xff]
      %v237 = vld [vmem:[%s219 + $0x80] sm:$0xff]
      %v238 = vld [vmem:[%s219 + $0x90] sm:$0xff]
      %v239 = vld [vmem:[%s219 + $0x98] sm:$0xff]
      %v240 = vld [vmem:[%s219 + $0xa8] sm:$0xff]
      %v241 = vld [vmem:[%s219 + $0xb0] sm:$0xff]
      %v242 = vld [vmem:[%s219 + $0xc0] sm:$0xff]
      %v243 = vld [vmem:[%s219 + $0xc8] sm:$0xff]
      %v244 = vld [vmem:[%s219 + $0xd8] sm:$0xff]
      %v245 = vld [vmem:[%s219 + $0xe0] sm:$0xff]
      %v246 = vld [vmem:[%s219 + $0xf0] sm:$0xff]
      %v247 = vld [vmem:[%s219 + $0xf8] sm:$0xff]
      %v248 = vld [vmem:[%s219 + $0x108] sm:$0xff]
      %v249 = vld [vmem:[%s219 + $0x110] sm:$0xff]
      %v250 = vld [vmem:[%s219 + $0x120] sm:$0xff]
      %v251 = vld [vmem:[%s219 + $0x128] sm:$0xff]
      %v252 = vld [vmem:[%s219 + $0x138] sm:$0xff]
      %v253 = vld [vmem:[%s219 + $0x140] sm:$0xff]
      %v254 = vld [vmem:[%s219 + $0x150] sm:$0xff]
      %v255 = vld [vmem:[%s219 + $0x158] sm:$0xff]
      %v256 = vld [vmem:[%s219 + $0x168] sm:$0xff]
      %v257 = vld [vmem:[%s219 + $0x170] sm:$0xff]
      %v258 = vld [vmem:[%s1] sm:$0x1]
      %v259 = vlaneseq
      %v260 = vshrl.u32 %v259, 7
      %v261 = vsub.s32 0, %v260
      %v262 = vrot.slane %v258, %v261
      %v263 = vmul.f32 %v226, %v262
      %v264 = vmul.f32 %v227, %v262
      %v265 = vmul.f32 %v228, %v262
      %v266 = vmul.f32 %v229, %v262
      %v267 = vmul.f32 %v230, %v262
      %v268 = vmul.f32 %v231, %v262
      %v269 = vmul.f32 %v232, %v262
      %v270 = vmul.f32 %v233, %v262
      %v271 = vmul.f32 %v234, %v262
      %v272 = vmul.f32 %v235, %v262
      %v273 = vmul.f32 %v236, %v262
      %v274 = vmul.f32 %v237, %v262
      %v275 = vmul.f32 %v238, %v262
      %v276 = vmul.f32 %v239, %v262
      %v277 = vmul.f32 %v240, %v262
      %v278 = vmul.f32 %v241, %v262
      %v279 = vmul.f32 %v242, %v262
      %v280 = vmul.f32 %v243, %v262
      %v281 = vmul.f32 %v244, %v262
      %v282 = vmul.f32 %v245, %v262
      %v283 = vmul.f32 %v246, %v262
      %v284 = vmul.f32 %v247, %v262
      %v285 = vmul.f32 %v248, %v262
      %v286 = vmul.f32 %v249, %v262
      %v287 = vmul.f32 %v250, %v262
      %v288 = vmul.f32 %v251, %v262
      %v289 = vmul.f32 %v252, %v262
      %v290 = vmul.f32 %v253, %v262
      %v291 = vmul.f32 %v254, %v262
      %v292 = vmul.f32 %v255, %v262
      %v293 = vmul.f32 %v256, %v262
      %v294 = vmul.f32 %v257, %v262
      %v295 = vadd.f32 %v263, 0.0
      %v296 = vadd.f32 %v264, 0.0
      %v297 = vadd.f32 %v265, 0.0
      %v298 = vadd.f32 %v266, 0.0
      %v299 = vadd.f32 %v267, 0.0
      %v300 = vadd.f32 %v268, 0.0
      %v301 = vadd.f32 %v269, 0.0
      %v302 = vadd.f32 %v270, 0.0
      %v303 = vadd.f32 %v271, 0.0
      %v304 = vadd.f32 %v272, 0.0
      %v305 = vadd.f32 %v273, 0.0
      %v306 = vadd.f32 %v274, 0.0
      %v307 = vadd.f32 %v275, 0.0
      %v308 = vadd.f32 %v276, 0.0
      %v309 = vadd.f32 %v277, 0.0
      %v310 = vadd.f32 %v278, 0.0
      %v311 = vadd.f32 %v279, 0.0
      %v312 = vadd.f32 %v280, 0.0
      %v313 = vadd.f32 %v281, 0.0
      %v314 = vadd.f32 %v282, 0.0
      %v315 = vadd.f32 %v283, 0.0
      %v316 = vadd.f32 %v284, 0.0
      %v317 = vadd.f32 %v285, 0.0
      %v318 = vadd.f32 %v286, 0.0
      %v319 = vadd.f32 %v287, 0.0
      %v320 = vadd.f32 %v288, 0.0
      %v321 = vadd.f32 %v289, 0.0
      %v322 = vadd.f32 %v290, 0.0
      %v323 = vadd.f32 %v291, 0.0
      %v324 = vadd.f32 %v292, 0.0
      %v325 = vadd.f32 %v293, 0.0
      %v326 = vadd.f32 %v294, 0.0
      %v327 = vld [vmem:[%s219 + $0x2] sm:$0xff]
      %v328 = vld [vmem:[%s219 + $0xa] sm:$0xff]
      %v329 = vld [vmem:[%s219 + $0x1a] sm:$0xff]
      %v330 = vld [vmem:[%s219 + $0x22] sm:$0xff]
      %v331 = vld [vmem:[%s219 + $0x32] sm:$0xff]
      %v332 = vld [vmem:[%s219 + $0x3a] sm:$0xff]
      %v333 = vld [vmem:[%s219 + $0x4a] sm:$0xff]
      %v334 = vld [vmem:[%s219 + $0x52] sm:$0xff]
      %v335 = vld [vmem:[%s219 + $0x62] sm:$0xff]
      %v336 = vld [vmem:[%s219 + $0x6a] sm:$0xff]
      %v337 = vld [vmem:[%s219 + $0x7a] sm:$0xff]
      %v338 = vld [vmem:[%s219 + $0x82] sm:$0xff]
      %v339 = vld [vmem:[%s219 + $0x92] sm:$0xff]
      %v340 = vld [vmem:[%s219 + $0x9a] sm:$0xff]
      %v341 = vld [vmem:[%s219 + $0xaa] sm:$0xff]
      %v342 = vld [vmem:[%s219 + $0xb2] sm:$0xff]
      %v343 = vld [vmem:[%s219 + $0xc2] sm:$0xff]
      %v344 = vld [vmem:[%s219 + $0xca] sm:$0xff]
      %v345 = vld [vmem:[%s219 + $0xda] sm:$0xff]
      %v346 = vld [vmem:[%s219 + $0xe2] sm:$0xff]
      %v347 = vld [vmem:[%s219 + $0xf2] sm:$0xff]
      %v348 = vld [vmem:[%s219 + $0xfa] sm:$0xff]
      %v349 = vld [vmem:[%s219 + $0x10a] sm:$0xff]
      %v350 = vld [vmem:[%s219 + $0x112] sm:$0xff]
      %v351 = vld [vmem:[%s219 + $0x122] sm:$0xff]
      %v352 = vld [vmem:[%s219 + $0x12a] sm:$0xff]
      %v353 = vld [vmem:[%s219 + $0x13a] sm:$0xff]
      %v354 = vld [vmem:[%s219 + $0x142] sm:$0xff]
      %v355 = vld [vmem:[%s219 + $0x152] sm:$0xff]
      %v356 = vld [vmem:[%s219 + $0x15a] sm:$0xff]
      %v357 = vld [vmem:[%s219 + $0x16a] sm:$0xff]
      %v358 = vld [vmem:[%s219 + $0x172] sm:$0xff]
      %v359 = vld [vmem:[%s1 + $0x1] sm:$0x1]
      %v360 = vlaneseq
      %v361 = vshrl.u32 %v360, 7
      %v362 = vsub.s32 0, %v361
      %v363 = vrot.slane %v359, %v362
      %v364 = vmul.f32 %v327, %v363
      %v365 = vmul.f32 %v328, %v363
      %v366 = vmul.f32 %v329, %v363
      %v367 = vmul.f32 %v330, %v363
      %v368 = vmul.f32 %v331, %v363
      %v369 = vmul.f32 %v332, %v363
      %v370 = vmul.f32 %v333, %v363
      %v371 = vmul.f32 %v334, %v363
      %v372 = vmul.f32 %v335, %v363
      %v373 = vmul.f32 %v336, %v363
      %v374 = vmul.f32 %v337, %v363
      %v375 = vmul.f32 %v338, %v363
      %v376 = vmul.f32 %v339, %v363
      %v377 = vmul.f32 %v340, %v363
      %v378 = vmul.f32 %v341, %v363
      %v379 = vmul.f32 %v342, %v363
      %v380 = vmul.f32 %v343, %v363
      %v381 = vmul.f32 %v344, %v363
      %v382 = vmul.f32 %v345, %v363
      %v383 = vmul.f32 %v346, %v363
      %v384 = vmul.f32 %v347, %v363
      %v385 = vmul.f32 %v348, %v363
      %v386 = vmul.f32 %v349, %v363
      %v387 = vmul.f32 %v350, %v363
      %v388 = vmul.f32 %v351, %v363
      %v389 = vmul.f32 %v352, %v363
      %v390 = vmul.f32 %v353, %v363
      %v391 = vmul.f32 %v354, %v363
      %v392 = vmul.f32 %v355, %v363
      %v393 = vmul.f32 %v356, %v363
      %v394 = vmul.f32 %v357, %v363
      %v395 = vmul.f32 %v358, %v363
      %v396 = vadd.f32 %v295, %v364
      %v397 = vadd.f32 %v296, %v365
      %v398 = vadd.f32 %v297, %v366
      %v399 = vadd.f32 %v298, %v367
      %v400 = vadd.f32 %v299, %v368
      %v401 = vadd.f32 %v300, %v369
      %v402 = vadd.f32 %v301, %v370
      %v403 = vadd.f32 %v302, %v371
      %v404 = vadd.f32 %v303, %v372
      %v405 = vadd.f32 %v304, %v373
      %v406 = vadd.f32 %v305, %v374
      %v407 = vadd.f32 %v306, %v375
      %v408 = vadd.f32 %v307, %v376
      %v409 = vadd.f32 %v308, %v377
      %v410 = vadd.f32 %v309, %v378
      %v411 = vadd.f32 %v310, %v379
      %v412 = vadd.f32 %v311, %v380
      %v413 = vadd.f32 %v312, %v381
      %v414 = vadd.f32 %v313, %v382
      %v415 = vadd.f32 %v314, %v383
      %v416 = vadd.f32 %v315, %v384
      %v417 = vadd.f32 %v316, %v385
      %v418 = vadd.f32 %v317, %v386
      %v419 = vadd.f32 %v318, %v387
      %v420 = vadd.f32 %v319, %v388
      %v421 = vadd.f32 %v320, %v389
      %v422 = vadd.f32 %v321, %v390
      %v423 = vadd.f32 %v322, %v391
      %v424 = vadd.f32 %v323, %v392
      %v425 = vadd.f32 %v324, %v393
      %v426 = vadd.f32 %v325, %v394
      %v427 = vadd.f32 %v326, %v395
      %v428 = vld [vmem:[%s219 + $0x4] sm:$0xff]
      %v429 = vld [vmem:[%s219 + $0xc] sm:$0xff]
      %v430 = vld [vmem:[%s219 + $0x1c] sm:$0xff]
      %v431 = vld [vmem:[%s219 + $0x24] sm:$0xff]
      %v432 = vld [vmem:[%s219 + $0x34] sm:$0xff]
      %v433 = vld [vmem:[%s219 + $0x3c] sm:$0xff]
      %v434 = vld [vmem:[%s219 + $0x4c] sm:$0xff]
      %v435 = vld [vmem:[%s219 + $0x54] sm:$0xff]
      %v436 = vld [vmem:[%s219 + $0x64] sm:$0xff]
      %v437 = vld [vmem:[%s219 + $0x6c] sm:$0xff]
      %v438 = vld [vmem:[%s219 + $0x7c] sm:$0xff]
      %v439 = vld [vmem:[%s219 + $0x84] sm:$0xff]
      %v440 = vld [vmem:[%s219 + $0x94] sm:$0xff]
      %v441 = vld [vmem:[%s219 + $0x9c] sm:$0xff]
      %v442 = vld [vmem:[%s219 + $0xac] sm:$0xff]
      %v443 = vld [vmem:[%s219 + $0xb4] sm:$0xff]
      %v444 = vld [vmem:[%s219 + $0xc4] sm:$0xff]
      %v445 = vld [vmem:[%s219 + $0xcc] sm:$0xff]
      %v446 = vld [vmem:[%s219 + $0xdc] sm:$0xff]
      %v447 = vld [vmem:[%s219 + $0xe4] sm:$0xff]
      %v448 = vld [vmem:[%s219 + $0xf4] sm:$0xff]
      %v449 = vld [vmem:[%s219 + $0xfc] sm:$0xff]
      %v450 = vld [vmem:[%s219 + $0x10c] sm:$0xff]
      %v451 = vld [vmem:[%s219 + $0x114] sm:$0xff]
      %v452 = vld [vmem:[%s219 + $0x124] sm:$0xff]
      %v453 = vld [vmem:[%s219 + $0x12c] sm:$0xff]
      %v454 = vld [vmem:[%s219 + $0x13c] sm:$0xff]
      %v455 = vld [vmem:[%s219 + $0x144] sm:$0xff]
      %v456 = vld [vmem:[%s219 + $0x154] sm:$0xff]
      %v457 = vld [vmem:[%s219 + $0x15c] sm:$0xff]
      %v458 = vld [vmem:[%s219 + $0x16c] sm:$0xff]
      %v459 = vld [vmem:[%s219 + $0x174] sm:$0xff]
      %v460 = vld [vmem:[%s1 + $0x2] sm:$0x1]
      %v461 = vlaneseq
      %v462 = vshrl.u32 %v461, 7
      %v463 = vsub.s32 0, %v462
      %v464 = vrot.slane %v460, %v463
      %v465 = vmul.f32 %v428, %v464
      %v466 = vmul.f32 %v429, %v464
      %v467 = vmul.f32 %v430, %v464
      %v468 = vmul.f32 %v431, %v464
      %v469 = vmul.f32 %v432, %v464
      %v470 = vmul.f32 %v433, %v464
      %v471 = vmul.f32 %v434, %v464
      %v472 = vmul.f32 %v435, %v464
      %v473 = vmul.f32 %v436, %v464
      %v474 = vmul.f32 %v437, %v464
      %v475 = vmul.f32 %v438, %v464
      %v476 = vmul.f32 %v439, %v464
      %v477 = vmul.f32 %v440, %v464
      %v478 = vmul.f32 %v441, %v464
      %v479 = vmul.f32 %v442, %v464
      %v480 = vmul.f32 %v443, %v464
      %v481 = vmul.f32 %v444, %v464
      %v482 = vmul.f32 %v445, %v464
      %v483 = vmul.f32 %v446, %v464
      %v484 = vmul.f32 %v447, %v464
      %v485 = vmul.f32 %v448, %v464
      %v486 = vmul.f32 %v449, %v464
      %v487 = vmul.f32 %v450, %v464
      %v488 = vmul.f32 %v451, %v464
      %v489 = vmul.f32 %v452, %v464
      %v490 = vmul.f32 %v453, %v464
      %v491 = vmul.f32 %v454, %v464
      %v492 = vmul.f32 %v455, %v464
      %v493 = vmul.f32 %v456, %v464
      %v494 = vmul.f32 %v457, %v464
      %v495 = vmul.f32 %v458, %v464
      %v496 = vmul.f32 %v459, %v464
      %v497 = vadd.f32 %v396, %v465
      %v498 = vadd.f32 %v397, %v466
      %v499 = vadd.f32 %v398, %v467
      %v500 = vadd.f32 %v399, %v468
      %v501 = vadd.f32 %v400, %v469
      %v502 = vadd.f32 %v401, %v470
      %v503 = vadd.f32 %v402, %v471
      %v504 = vadd.f32 %v403, %v472
      %v505 = vadd.f32 %v404, %v473
      %v506 = vadd.f32 %v405, %v474
      %v507 = vadd.f32 %v406, %v475
      %v508 = vadd.f32 %v407, %v476
      %v509 = vadd.f32 %v408, %v477
      %v510 = vadd.f32 %v409, %v478
      %v511 = vadd.f32 %v410, %v479
      %v512 = vadd.f32 %v411, %v480
      %v513 = vadd.f32 %v412, %v481
      %v514 = vadd.f32 %v413, %v482
      %v515 = vadd.f32 %v414, %v483
      %v516 = vadd.f32 %v415, %v484
      %v517 = vadd.f32 %v416, %v485
      %v518 = vadd.f32 %v417, %v486
      %v519 = vadd.f32 %v418, %v487
      %v520 = vadd.f32 %v419, %v488
      %v521 = vadd.f32 %v420, %v489
      %v522 = vadd.f32 %v421, %v490
      %v523 = vadd.f32 %v422, %v491
      %v524 = vadd.f32 %v423, %v492
      %v525 = vadd.f32 %v424, %v493
      %v526 = vadd.f32 %v425, %v494
      %v527 = vadd.f32 %v426, %v495
      %v528 = vadd.f32 %v427, %v496
      %s529 = scalar_lea.vmem %s219, 48
      %v530 = vld [vmem:[%s529] sm:$0xff]
      %v531 = vld [vmem:[%s529 + $0x8] sm:$0xff]
      %v532 = vld [vmem:[%s529 + $0x18] sm:$0xff]
      %v533 = vld [vmem:[%s529 + $0x20] sm:$0xff]
      %v534 = vld [vmem:[%s529 + $0x30] sm:$0xff]
      %v535 = vld [vmem:[%s529 + $0x38] sm:$0xff]
      %v536 = vld [vmem:[%s529 + $0x48] sm:$0xff]
      %v537 = vld [vmem:[%s529 + $0x50] sm:$0xff]
      %v538 = vld [vmem:[%s529 + $0x60] sm:$0xff]
      %v539 = vld [vmem:[%s529 + $0x68] sm:$0xff]
      %v540 = vld [vmem:[%s529 + $0x78] sm:$0xff]
      %v541 = vld [vmem:[%s529 + $0x80] sm:$0xff]
      %v542 = vld [vmem:[%s529 + $0x90] sm:$0xff]
      %v543 = vld [vmem:[%s529 + $0x98] sm:$0xff]
      %v544 = vld [vmem:[%s529 + $0xa8] sm:$0xff]
      %v545 = vld [vmem:[%s529 + $0xb0] sm:$0xff]
      %v546 = vld [vmem:[%s529 + $0xc0] sm:$0xff]
      %v547 = vld [vmem:[%s529 + $0xc8] sm:$0xff]
      %v548 = vld [vmem:[%s529 + $0xd8] sm:$0xff]
      %v549 = vld [vmem:[%s529 + $0xe0] sm:$0xff]
      %v550 = vld [vmem:[%s529 + $0xf0] sm:$0xff]
      %v551 = vld [vmem:[%s529 + $0xf8] sm:$0xff]
      %v552 = vld [vmem:[%s529 + $0x108] sm:$0xff]
      %v553 = vld [vmem:[%s529 + $0x110] sm:$0xff]
      %v554 = vld [vmem:[%s529 + $0x120] sm:$0xff]
      %v555 = vld [vmem:[%s529 + $0x128] sm:$0xff]
      %v556 = vld [vmem:[%s529 + $0x138] sm:$0xff]
      %v557 = vld [vmem:[%s529 + $0x140] sm:$0xff]
      %v558 = vld [vmem:[%s529 + $0x150] sm:$0xff]
      %v559 = vld [vmem:[%s529 + $0x158] sm:$0xff]
      %v560 = vld [vmem:[%s529 + $0x168] sm:$0xff]
      %v561 = vld [vmem:[%s529 + $0x170] sm:$0xff]
      %v562 = vld [vmem:[%s1 + $0x3] sm:$0x1]
      %v563 = vlaneseq
      %v564 = vshrl.u32 %v563, 7
      %v565 = vsub.s32 0, %v564
      %v566 = vrot.slane %v562, %v565
      %v567 = vmul.f32 %v530, %v566
      %v568 = vmul.f32 %v531, %v566
      %v569 = vmul.f32 %v532, %v566
      %v570 = vmul.f32 %v533, %v566
      %v571 = vmul.f32 %v534, %v566
      %v572 = vmul.f32 %v535, %v566
      %v573 = vmul.f32 %v536, %v566
      %v574 = vmul.f32 %v537, %v566
      %v575 = vmul.f32 %v538, %v566
      %v576 = vmul.f32 %v539, %v566
      %v577 = vmul.f32 %v540, %v566
      %v578 = vmul.f32 %v541, %v566
      %v579 = vmul.f32 %v542, %v566
      %v580 = vmul.f32 %v543, %v566
      %v581 = vmul.f32 %v544, %v566
      %v582 = vmul.f32 %v545, %v566
      %v583 = vmul.f32 %v546, %v566
      %v584 = vmul.f32 %v547, %v566
      %v585 = vmul.f32 %v548, %v566
      %v586 = vmul.f32 %v549, %v566
      %v587 = vmul.f32 %v550, %v566
      %v588 = vmul.f32 %v551, %v566
      %v589 = vmul.f32 %v552, %v566
      %v590 = vmul.f32 %v553, %v566
      %v591 = vmul.f32 %v554, %v566
      %v592 = vmul.f32 %v555, %v566
      %v593 = vmul.f32 %v556, %v566
      %v594 = vmul.f32 %v557, %v566
      %v595 = vmul.f32 %v558, %v566
      %v596 = vmul.f32 %v559, %v566
      %v597 = vmul.f32 %v560, %v566
      %v598 = vmul.f32 %v561, %v566
      %v599 = vadd.f32 %v497, %v567
      %v600 = vadd.f32 %v498, %v568
      %v601 = vadd.f32 %v499, %v569
      %v602 = vadd.f32 %v500, %v570
      %v603 = vadd.f32 %v501, %v571
      %v604 = vadd.f32 %v502, %v572
      %v605 = vadd.f32 %v503, %v573
      %v606 = vadd.f32 %v504, %v574
      %v607 = vadd.f32 %v505, %v575
      %v608 = vadd.f32 %v506, %v576
      %v609 = vadd.f32 %v507, %v577
      %v610 = vadd.f32 %v508, %v578
      %v611 = vadd.f32 %v509, %v579
      %v612 = vadd.f32 %v510, %v580
      %v613 = vadd.f32 %v511, %v581
      %v614 = vadd.f32 %v512, %v582
      %v615 = vadd.f32 %v513, %v583
      %v616 = vadd.f32 %v514, %v584
      %v617 = vadd.f32 %v515, %v585
      %v618 = vadd.f32 %v516, %v586
      %v619 = vadd.f32 %v517, %v587
      %v620 = vadd.f32 %v518, %v588
      %v621 = vadd.f32 %v519, %v589
      %v622 = vadd.f32 %v520, %v590
      %v623 = vadd.f32 %v521, %v591
      %v624 = vadd.f32 %v522, %v592
      %v625 = vadd.f32 %v523, %v593
      %v626 = vadd.f32 %v524, %v594
      %v627 = vadd.f32 %v525, %v595
      %v628 = vadd.f32 %v526, %v596
      %v629 = vadd.f32 %v527, %v597
      %v630 = vadd.f32 %v528, %v598
      %v631 = vld [vmem:[%s529 + $0x2] sm:$0xff]
      %v632 = vld [vmem:[%s529 + $0xa] sm:$0xff]
      %v633 = vld [vmem:[%s529 + $0x1a] sm:$0xff]
      %v634 = vld [vmem:[%s529 + $0x22] sm:$0xff]
      %v635 = vld [vmem:[%s529 + $0x32] sm:$0xff]
      %v636 = vld [vmem:[%s529 + $0x3a] sm:$0xff]
      %v637 = vld [vmem:[%s529 + $0x4a] sm:$0xff]
      %v638 = vld [vmem:[%s529 + $0x52] sm:$0xff]
      %v639 = vld [vmem:[%s529 + $0x62] sm:$0xff]
      %v640 = vld [vmem:[%s529 + $0x6a] sm:$0xff]
      %v641 = vld [vmem:[%s529 + $0x7a] sm:$0xff]
      %v642 = vld [vmem:[%s529 + $0x82] sm:$0xff]
      %v643 = vld [vmem:[%s529 + $0x92] sm:$0xff]
      %v644 = vld [vmem:[%s529 + $0x9a] sm:$0xff]
      %v645 = vld [vmem:[%s529 + $0xaa] sm:$0xff]
      %v646 = vld [vmem:[%s529 + $0xb2] sm:$0xff]
      %v647 = vld [vmem:[%s529 + $0xc2] sm:$0xff]
      %v648 = vld [vmem:[%s529 + $0xca] sm:$0xff]
      %v649 = vld [vmem:[%s529 + $0xda] sm:$0xff]
      %v650 = vld [vmem:[%s529 + $0xe2] sm:$0xff]
      %v651 = vld [vmem:[%s529 + $0xf2] sm:$0xff]
      %v652 = vld [vmem:[%s529 + $0xfa] sm:$0xff]
      %v653 = vld [vmem:[%s529 + $0x10a] sm:$0xff]
      %v654 = vld [vmem:[%s529 + $0x112] sm:$0xff]
      %v655 = vld [vmem:[%s529 + $0x122] sm:$0xff]
      %v656 = vld [vmem:[%s529 + $0x12a] sm:$0xff]
      %v657 = vld [vmem:[%s529 + $0x13a] sm:$0xff]
      %v658 = vld [vmem:[%s529 + $0x142] sm:$0xff]
      %v659 = vld [vmem:[%s529 + $0x152] sm:$0xff]
      %v660 = vld [vmem:[%s529 + $0x15a] sm:$0xff]
      %v661 = vld [vmem:[%s529 + $0x16a] sm:$0xff]
      %v662 = vld [vmem:[%s529 + $0x172] sm:$0xff]
      %v663 = vld [vmem:[%s1 + $0x4] sm:$0x1]
      %v664 = vlaneseq
      %v665 = vshrl.u32 %v664, 7
      %v666 = vsub.s32 0, %v665
      %v667 = vrot.slane %v663, %v666
      %v668 = vmul.f32 %v631, %v667
      %v669 = vmul.f32 %v632, %v667
      %v670 = vmul.f32 %v633, %v667
      %v671 = vmul.f32 %v634, %v667
      %v672 = vmul.f32 %v635, %v667
      %v673 = vmul.f32 %v636, %v667
      %v674 = vmul.f32 %v637, %v667
      %v675 = vmul.f32 %v638, %v667
      %v676 = vmul.f32 %v639, %v667
      %v677 = vmul.f32 %v640, %v667
      %v678 = vmul.f32 %v641, %v667
      %v679 = vmul.f32 %v642, %v667
      %v680 = vmul.f32 %v643, %v667
      %v681 = vmul.f32 %v644, %v667
      %v682 = vmul.f32 %v645, %v667
      %v683 = vmul.f32 %v646, %v667
      %v684 = vmul.f32 %v647, %v667
      %v685 = vmul.f32 %v648, %v667
      %v686 = vmul.f32 %v649, %v667
      %v687 = vmul.f32 %v650, %v667
      %v688 = vmul.f32 %v651, %v667
      %v689 = vmul.f32 %v652, %v667
      %v690 = vmul.f32 %v653, %v667
      %v691 = vmul.f32 %v654, %v667
      %v692 = vmul.f32 %v655, %v667
      %v693 = vmul.f32 %v656, %v667
      %v694 = vmul.f32 %v657, %v667
      %v695 = vmul.f32 %v658, %v667
      %v696 = vmul.f32 %v659, %v667
      %v697 = vmul.f32 %v660, %v667
      %v698 = vmul.f32 %v661, %v667
      %v699 = vmul.f32 %v662, %v667
      %v700 = vadd.f32 %v599, %v668
      %v701 = vadd.f32 %v600, %v669
      %v702 = vadd.f32 %v601, %v670
      %v703 = vadd.f32 %v602, %v671
      %v704 = vadd.f32 %v603, %v672
      %v705 = vadd.f32 %v604, %v673
      %v706 = vadd.f32 %v605, %v674
      %v707 = vadd.f32 %v606, %v675
      %v708 = vadd.f32 %v607, %v676
      %v709 = vadd.f32 %v608, %v677
      %v710 = vadd.f32 %v609, %v678
      %v711 = vadd.f32 %v610, %v679
      %v712 = vadd.f32 %v611, %v680
      %v713 = vadd.f32 %v612, %v681
      %v714 = vadd.f32 %v613, %v682
      %v715 = vadd.f32 %v614, %v683
      %v716 = vadd.f32 %v615, %v684
      %v717 = vadd.f32 %v616, %v685
      %v718 = vadd.f32 %v617, %v686
      %v719 = vadd.f32 %v618, %v687
      %v720 = vadd.f32 %v619, %v688
      %v721 = vadd.f32 %v620, %v689
      %v722 = vadd.f32 %v621, %v690
      %v723 = vadd.f32 %v622, %v691
      %v724 = vadd.f32 %v623, %v692
      %v725 = vadd.f32 %v624, %v693
      %v726 = vadd.f32 %v625, %v694
      %v727 = vadd.f32 %v626, %v695
      %v728 = vadd.f32 %v627, %v696
      %v729 = vadd.f32 %v628, %v697
      %v730 = vadd.f32 %v629, %v698
      %v731 = vadd.f32 %v630, %v699
      %v732 = vld [vmem:[%s529 + $0x4] sm:$0xff]
      %v733 = vld [vmem:[%s529 + $0xc] sm:$0xff]
      %v734 = vld [vmem:[%s529 + $0x1c] sm:$0xff]
      %v735 = vld [vmem:[%s529 + $0x24] sm:$0xff]
      %v736 = vld [vmem:[%s529 + $0x34] sm:$0xff]
      %v737 = vld [vmem:[%s529 + $0x3c] sm:$0xff]
      %v738 = vld [vmem:[%s529 + $0x4c] sm:$0xff]
      %v739 = vld [vmem:[%s529 + $0x54] sm:$0xff]
      %v740 = vld [vmem:[%s529 + $0x64] sm:$0xff]
      %v741 = vld [vmem:[%s529 + $0x6c] sm:$0xff]
      %v742 = vld [vmem:[%s529 + $0x7c] sm:$0xff]
      %v743 = vld [vmem:[%s529 + $0x84] sm:$0xff]
      %v744 = vld [vmem:[%s529 + $0x94] sm:$0xff]
      %v745 = vld [vmem:[%s529 + $0x9c] sm:$0xff]
      %v746 = vld [vmem:[%s529 + $0xac] sm:$0xff]
      %v747 = vld [vmem:[%s529 + $0xb4] sm:$0xff]
      %v748 = vld [vmem:[%s529 + $0xc4] sm:$0xff]
      %v749 = vld [vmem:[%s529 + $0xcc] sm:$0xff]
      %v750 = vld [vmem:[%s529 + $0xdc] sm:$0xff]
      %v751 = vld [vmem:[%s529 + $0xe4] sm:$0xff]
      %v752 = vld [vmem:[%s529 + $0xf4] sm:$0xff]
      %v753 = vld [vmem:[%s529 + $0xfc] sm:$0xff]
      %v754 = vld [vmem:[%s529 + $0x10c] sm:$0xff]
      %v755 = vld [vmem:[%s529 + $0x114] sm:$0xff]
      %v756 = vld [vmem:[%s529 + $0x124] sm:$0xff]
      %v757 = vld [vmem:[%s529 + $0x12c] sm:$0xff]
      %v758 = vld [vmem:[%s529 + $0x13c] sm:$0xff]
      %v759 = vld [vmem:[%s529 + $0x144] sm:$0xff]
      %v760 = vld [vmem:[%s529 + $0x154] sm:$0xff]
      %v761 = vld [vmem:[%s529 + $0x15c] sm:$0xff]
      %v762 = vld [vmem:[%s529 + $0x16c] sm:$0xff]
      %v763 = vld [vmem:[%s529 + $0x174] sm:$0xff]
      %v764 = vld [vmem:[%s1 + $0x5] sm:$0x1]
      %v765 = vlaneseq
      %v766 = vshrl.u32 %v765, 7
      %v767 = vsub.s32 0, %v766
      %v768 = vrot.slane %v764, %v767
      %v769 = vmul.f32 %v732, %v768
      %v770 = vmul.f32 %v733, %v768
      %v771 = vmul.f32 %v734, %v768
      %v772 = vmul.f32 %v735, %v768
      %v773 = vmul.f32 %v736, %v768
      %v774 = vmul.f32 %v737, %v768
      %v775 = vmul.f32 %v738, %v768
      %v776 = vmul.f32 %v739, %v768
      %v777 = vmul.f32 %v740, %v768
      %v778 = vmul.f32 %v741, %v768
      %v779 = vmul.f32 %v742, %v768
      %v780 = vmul.f32 %v743, %v768
      %v781 = vmul.f32 %v744, %v768
      %v782 = vmul.f32 %v745, %v768
      %v783 = vmul.f32 %v746, %v768
      %v784 = vmul.f32 %v747, %v768
      %v785 = vmul.f32 %v748, %v768
      %v786 = vmul.f32 %v749, %v768
      %v787 = vmul.f32 %v750, %v768
      %v788 = vmul.f32 %v751, %v768
      %v789 = vmul.f32 %v752, %v768
      %v790 = vmul.f32 %v753, %v768
      %v791 = vmul.f32 %v754, %v768
      %v792 = vmul.f32 %v755, %v768
      %v793 = vmul.f32 %v756, %v768
      %v794 = vmul.f32 %v757, %v768
      %v795 = vmul.f32 %v758, %v768
      %v796 = vmul.f32 %v759, %v768
      %v797 = vmul.f32 %v760, %v768
      %v798 = vmul.f32 %v761, %v768
      %v799 = vmul.f32 %v762, %v768
      %v800 = vmul.f32 %v763, %v768
      %v801 = vadd.f32 %v700, %v769
      %v802 = vadd.f32 %v701, %v770
      %v803 = vadd.f32 %v702, %v771
      %v804 = vadd.f32 %v703, %v772
      %v805 = vadd.f32 %v704, %v773
      %v806 = vadd.f32 %v705, %v774
      %v807 = vadd.f32 %v706, %v775
      %v808 = vadd.f32 %v707, %v776
      %v809 = vadd.f32 %v708, %v777
      %v810 = vadd.f32 %v709, %v778
      %v811 = vadd.f32 %v710, %v779
      %v812 = vadd.f32 %v711, %v780
      %v813 = vadd.f32 %v712, %v781
      %v814 = vadd.f32 %v713, %v782
      %v815 = vadd.f32 %v714, %v783
      %v816 = vadd.f32 %v715, %v784
      %v817 = vadd.f32 %v716, %v785
      %v818 = vadd.f32 %v717, %v786
      %v819 = vadd.f32 %v718, %v787
      %v820 = vadd.f32 %v719, %v788
      %v821 = vadd.f32 %v720, %v789
      %v822 = vadd.f32 %v721, %v790
      %v823 = vadd.f32 %v722, %v791
      %v824 = vadd.f32 %v723, %v792
      %v825 = vadd.f32 %v724, %v793
      %v826 = vadd.f32 %v725, %v794
      %v827 = vadd.f32 %v726, %v795
      %v828 = vadd.f32 %v727, %v796
      %v829 = vadd.f32 %v728, %v797
      %v830 = vadd.f32 %v729, %v798
      %v831 = vadd.f32 %v730, %v799
      %v832 = vadd.f32 %v731, %v800
      %s833 = scalar_lea.vmem %s219, 96
      %v834 = vld [vmem:[%s833] sm:$0xff]
      %v835 = vld [vmem:[%s833 + $0x8] sm:$0xff]
      %v836 = vld [vmem:[%s833 + $0x18] sm:$0xff]
      %v837 = vld [vmem:[%s833 + $0x20] sm:$0xff]
      %v838 = vld [vmem:[%s833 + $0x30] sm:$0xff]
      %v839 = vld [vmem:[%s833 + $0x38] sm:$0xff]
      %v840 = vld [vmem:[%s833 + $0x48] sm:$0xff]
      %v841 = vld [vmem:[%s833 + $0x50] sm:$0xff]
      %v842 = vld [vmem:[%s833 + $0x60] sm:$0xff]
      %v843 = vld [vmem:[%s833 + $0x68] sm:$0xff]
      %v844 = vld [vmem:[%s833 + $0x78] sm:$0xff]
      %v845 = vld [vmem:[%s833 + $0x80] sm:$0xff]
      %v846 = vld [vmem:[%s833 + $0x90] sm:$0xff]
      %v847 = vld [vmem:[%s833 + $0x98] sm:$0xff]
      %v848 = vld [vmem:[%s833 + $0xa8] sm:$0xff]
      %v849 = vld [vmem:[%s833 + $0xb0] sm:$0xff]
      %v850 = vld [vmem:[%s833 + $0xc0] sm:$0xff]
      %v851 = vld [vmem:[%s833 + $0xc8] sm:$0xff]
      %v852 = vld [vmem:[%s833 + $0xd8] sm:$0xff]
      %v853 = vld [vmem:[%s833 + $0xe0] sm:$0xff]
      %v854 = vld [vmem:[%s833 + $0xf0] sm:$0xff]
      %v855 = vld [vmem:[%s833 + $0xf8] sm:$0xff]
      %v856 = vld [vmem:[%s833 + $0x108] sm:$0xff]
      %v857 = vld [vmem:[%s833 + $0x110] sm:$0xff]
      %v858 = vld [vmem:[%s833 + $0x120] sm:$0xff]
      %v859 = vld [vmem:[%s833 + $0x128] sm:$0xff]
      %v860 = vld [vmem:[%s833 + $0x138] sm:$0xff]
      %v861 = vld [vmem:[%s833 + $0x140] sm:$0xff]
      %v862 = vld [vmem:[%s833 + $0x150] sm:$0xff]
      %v863 = vld [vmem:[%s833 + $0x158] sm:$0xff]
      %v864 = vld [vmem:[%s833 + $0x168] sm:$0xff]
      %v865 = vld [vmem:[%s833 + $0x170] sm:$0xff]
      %v866 = vld [vmem:[%s1 + $0x6] sm:$0x1]
      %v867 = vlaneseq
      %v868 = vshrl.u32 %v867, 7
      %v869 = vsub.s32 0, %v868
      %v870 = vrot.slane %v866, %v869
      %v871 = vmul.f32 %v834, %v870
      %v872 = vmul.f32 %v835, %v870
      %v873 = vmul.f32 %v836, %v870
      %v874 = vmul.f32 %v837, %v870
      %v875 = vmul.f32 %v838, %v870
      %v876 = vmul.f32 %v839, %v870
      %v877 = vmul.f32 %v840, %v870
      %v878 = vmul.f32 %v841, %v870
      %v879 = vmul.f32 %v842, %v870
      %v880 = vmul.f32 %v843, %v870
      %v881 = vmul.f32 %v844, %v870
      %v882 = vmul.f32 %v845, %v870
      %v883 = vmul.f32 %v846, %v870
      %v884 = vmul.f32 %v847, %v870
      %v885 = vmul.f32 %v848, %v870
      %v886 = vmul.f32 %v849, %v870
      %v887 = vmul.f32 %v850, %v870
      %v888 = vmul.f32 %v851, %v870
      %v889 = vmul.f32 %v852, %v870
      %v890 = vmul.f32 %v853, %v870
      %v891 = vmul.f32 %v854, %v870
      %v892 = vmul.f32 %v855, %v870
      %v893 = vmul.f32 %v856, %v870
      %v894 = vmul.f32 %v857, %v870
      %v895 = vmul.f32 %v858, %v870
      %v896 = vmul.f32 %v859, %v870
      %v897 = vmul.f32 %v860, %v870
      %v898 = vmul.f32 %v861, %v870
      %v899 = vmul.f32 %v862, %v870
      %v900 = vmul.f32 %v863, %v870
      %v901 = vmul.f32 %v864, %v870
      %v902 = vmul.f32 %v865, %v870
      %v903 = vadd.f32 %v801, %v871
      %v904 = vadd.f32 %v802, %v872
      %v905 = vadd.f32 %v803, %v873
      %v906 = vadd.f32 %v804, %v874
      %v907 = vadd.f32 %v805, %v875
      %v908 = vadd.f32 %v806, %v876
      %v909 = vadd.f32 %v807, %v877
      %v910 = vadd.f32 %v808, %v878
      %v911 = vadd.f32 %v809, %v879
      %v912 = vadd.f32 %v810, %v880
      %v913 = vadd.f32 %v811, %v881
      %v914 = vadd.f32 %v812, %v882
      %v915 = vadd.f32 %v813, %v883
      %v916 = vadd.f32 %v814, %v884
      %v917 = vadd.f32 %v815, %v885
      %v918 = vadd.f32 %v816, %v886
      %v919 = vadd.f32 %v817, %v887
      %v920 = vadd.f32 %v818, %v888
      %v921 = vadd.f32 %v819, %v889
      %v922 = vadd.f32 %v820, %v890
      %v923 = vadd.f32 %v821, %v891
      %v924 = vadd.f32 %v822, %v892
      %v925 = vadd.f32 %v823, %v893
      %v926 = vadd.f32 %v824, %v894
      %v927 = vadd.f32 %v825, %v895
      %v928 = vadd.f32 %v826, %v896
      %v929 = vadd.f32 %v827, %v897
      %v930 = vadd.f32 %v828, %v898
      %v931 = vadd.f32 %v829, %v899
      %v932 = vadd.f32 %v830, %v900
      %v933 = vadd.f32 %v831, %v901
      %v934 = vadd.f32 %v832, %v902
      %v935 = vld [vmem:[%s833 + $0x2] sm:$0xff]
      %v936 = vld [vmem:[%s833 + $0xa] sm:$0xff]
      %v937 = vld [vmem:[%s833 + $0x1a] sm:$0xff]
      %v938 = vld [vmem:[%s833 + $0x22] sm:$0xff]
      %v939 = vld [vmem:[%s833 + $0x32] sm:$0xff]
      %v940 = vld [vmem:[%s833 + $0x3a] sm:$0xff]
      %v941 = vld [vmem:[%s833 + $0x4a] sm:$0xff]
      %v942 = vld [vmem:[%s833 + $0x52] sm:$0xff]
      %v943 = vld [vmem:[%s833 + $0x62] sm:$0xff]
      %v944 = vld [vmem:[%s833 + $0x6a] sm:$0xff]
      %v945 = vld [vmem:[%s833 + $0x7a] sm:$0xff]
      %v946 = vld [vmem:[%s833 + $0x82] sm:$0xff]
      %v947 = vld [vmem:[%s833 + $0x92] sm:$0xff]
      %v948 = vld [vmem:[%s833 + $0x9a] sm:$0xff]
      %v949 = vld [vmem:[%s833 + $0xaa] sm:$0xff]
      %v950 = vld [vmem:[%s833 + $0xb2] sm:$0xff]
      %v951 = vld [vmem:[%s833 + $0xc2] sm:$0xff]
      %v952 = vld [vmem:[%s833 + $0xca] sm:$0xff]
      %v953 = vld [vmem:[%s833 + $0xda] sm:$0xff]
      %v954 = vld [vmem:[%s833 + $0xe2] sm:$0xff]
      %v955 = vld [vmem:[%s833 + $0xf2] sm:$0xff]
      %v956 = vld [vmem:[%s833 + $0xfa] sm:$0xff]
      %v957 = vld [vmem:[%s833 + $0x10a] sm:$0xff]
      %v958 = vld [vmem:[%s833 + $0x112] sm:$0xff]
      %v959 = vld [vmem:[%s833 + $0x122] sm:$0xff]
      %v960 = vld [vmem:[%s833 + $0x12a] sm:$0xff]
      %v961 = vld [vmem:[%s833 + $0x13a] sm:$0xff]
      %v962 = vld [vmem:[%s833 + $0x142] sm:$0xff]
      %v963 = vld [vmem:[%s833 + $0x152] sm:$0xff]
      %v964 = vld [vmem:[%s833 + $0x15a] sm:$0xff]
      %v965 = vld [vmem:[%s833 + $0x16a] sm:$0xff]
      %v966 = vld [vmem:[%s833 + $0x172] sm:$0xff]
      %v967 = vld [vmem:[%s1 + $0x7] sm:$0x1]
      %v968 = vlaneseq
      %v969 = vshrl.u32 %v968, 7
      %v970 = vsub.s32 0, %v969
      %v971 = vrot.slane %v967, %v970
      %v972 = vmul.f32 %v935, %v971
      %v973 = vmul.f32 %v936, %v971
      %v974 = vmul.f32 %v937, %v971
      %v975 = vmul.f32 %v938, %v971
      %v976 = vmul.f32 %v939, %v971
      %v977 = vmul.f32 %v940, %v971
      %v978 = vmul.f32 %v941, %v971
      %v979 = vmul.f32 %v942, %v971
      %v980 = vmul.f32 %v943, %v971
      %v981 = vmul.f32 %v944, %v971
      %v982 = vmul.f32 %v945, %v971
      %v983 = vmul.f32 %v946, %v971
      %v984 = vmul.f32 %v947, %v971
      %v985 = vmul.f32 %v948, %v971
      %v986 = vmul.f32 %v949, %v971
      %v987 = vmul.f32 %v950, %v971
      %v988 = vmul.f32 %v951, %v971
      %v989 = vmul.f32 %v952, %v971
      %v990 = vmul.f32 %v953, %v971
      %v991 = vmul.f32 %v954, %v971
      %v992 = vmul.f32 %v955, %v971
      %v993 = vmul.f32 %v956, %v971
      %v994 = vmul.f32 %v957, %v971
      %v995 = vmul.f32 %v958, %v971
      %v996 = vmul.f32 %v959, %v971
      %v997 = vmul.f32 %v960, %v971
      %v998 = vmul.f32 %v961, %v971
      %v999 = vmul.f32 %v962, %v971
      %v1000 = vmul.f32 %v963, %v971
      %v1001 = vmul.f32 %v964, %v971
      %v1002 = vmul.f32 %v965, %v971
      %v1003 = vmul.f32 %v966, %v971
      %v1004 = vadd.f32 %v903, %v972
      %v1005 = vadd.f32 %v904, %v973
      %v1006 = vadd.f32 %v905, %v974
      %v1007 = vadd.f32 %v906, %v975
      %v1008 = vadd.f32 %v907, %v976
      %v1009 = vadd.f32 %v908, %v977
      %v1010 = vadd.f32 %v909, %v978
      %v1011 = vadd.f32 %v910, %v979
      %v1012 = vadd.f32 %v911, %v980
      %v1013 = vadd.f32 %v912, %v981
      %v1014 = vadd.f32 %v913, %v982
      %v1015 = vadd.f32 %v914, %v983
      %v1016 = vadd.f32 %v915, %v984
      %v1017 = vadd.f32 %v916, %v985
      %v1018 = vadd.f32 %v917, %v986
      %v1019 = vadd.f32 %v918, %v987
      %v1020 = vadd.f32 %v919, %v988
      %v1021 = vadd.f32 %v920, %v989
      %v1022 = vadd.f32 %v921, %v990
      %v1023 = vadd.f32 %v922, %v991
      %v1024 = vadd.f32 %v923, %v992
      %v1025 = vadd.f32 %v924, %v993
      %v1026 = vadd.f32 %v925, %v994
      %v1027 = vadd.f32 %v926, %v995
      %v1028 = vadd.f32 %v927, %v996
      %v1029 = vadd.f32 %v928, %v997
      %v1030 = vadd.f32 %v929, %v998
      %v1031 = vadd.f32 %v930, %v999
      %v1032 = vadd.f32 %v931, %v1000
      %v1033 = vadd.f32 %v932, %v1001
      %v1034 = vadd.f32 %v933, %v1002
      %v1035 = vadd.f32 %v934, %v1003
      %v1036 = vld [vmem:[%s833 + $0x4] sm:$0xff]
      %v1037 = vld [vmem:[%s833 + $0xc] sm:$0xff]
      %v1038 = vld [vmem:[%s833 + $0x1c] sm:$0xff]
      %v1039 = vld [vmem:[%s833 + $0x24] sm:$0xff]
      %v1040 = vld [vmem:[%s833 + $0x34] sm:$0xff]
      %v1041 = vld [vmem:[%s833 + $0x3c] sm:$0xff]
      %v1042 = vld [vmem:[%s833 + $0x4c] sm:$0xff]
      %v1043 = vld [vmem:[%s833 + $0x54] sm:$0xff]
      %v1044 = vld [vmem:[%s833 + $0x64] sm:$0xff]
      %v1045 = vld [vmem:[%s833 + $0x6c] sm:$0xff]
      %v1046 = vld [vmem:[%s833 + $0x7c] sm:$0xff]
      %v1047 = vld [vmem:[%s833 + $0x84] sm:$0xff]
      %v1048 = vld [vmem:[%s833 + $0x94] sm:$0xff]
      %v1049 = vld [vmem:[%s833 + $0x9c] sm:$0xff]
      %v1050 = vld [vmem:[%s833 + $0xac] sm:$0xff]
      %v1051 = vld [vmem:[%s833 + $0xb4] sm:$0xff]
      %v1052 = vld [vmem:[%s833 + $0xc4] sm:$0xff]
      %v1053 = vld [vmem:[%s833 + $0xcc] sm:$0xff]
      %v1054 = vld [vmem:[%s833 + $0xdc] sm:$0xff]
      %v1055 = vld [vmem:[%s833 + $0xe4] sm:$0xff]
      %v1056 = vld [vmem:[%s833 + $0xf4] sm:$0xff]
      %v1057 = vld [vmem:[%s833 + $0xfc] sm:$0xff]
      %v1058 = vld [vmem:[%s833 + $0x10c] sm:$0xff]
      %v1059 = vld [vmem:[%s833 + $0x114] sm:$0xff]
      %v1060 = vld [vmem:[%s833 + $0x124] sm:$0xff]
      %v1061 = vld [vmem:[%s833 + $0x12c] sm:$0xff]
      %v1062 = vld [vmem:[%s833 + $0x13c] sm:$0xff]
      %v1063 = vld [vmem:[%s833 + $0x144] sm:$0xff]
      %v1064 = vld [vmem:[%s833 + $0x154] sm:$0xff]
      %v1065 = vld [vmem:[%s833 + $0x15c] sm:$0xff]
      %v1066 = vld [vmem:[%s833 + $0x16c] sm:$0xff]
      %v1067 = vld [vmem:[%s833 + $0x174] sm:$0xff]
      %v1068 = vld [vmem:[%s1 + $0x8] sm:$0x1]
      %v1069 = vlaneseq
      %v1070 = vshrl.u32 %v1069, 7
      %v1071 = vsub.s32 0, %v1070
      %v1072 = vrot.slane %v1068, %v1071
      %v1073 = vmul.f32 %v1036, %v1072
      %v1074 = vmul.f32 %v1037, %v1072
      %v1075 = vmul.f32 %v1038, %v1072
      %v1076 = vmul.f32 %v1039, %v1072
      %v1077 = vmul.f32 %v1040, %v1072
      %v1078 = vmul.f32 %v1041, %v1072
      %v1079 = vmul.f32 %v1042, %v1072
      %v1080 = vmul.f32 %v1043, %v1072
      %v1081 = vmul.f32 %v1044, %v1072
      %v1082 = vmul.f32 %v1045, %v1072
      %v1083 = vmul.f32 %v1046, %v1072
      %v1084 = vmul.f32 %v1047, %v1072
      %v1085 = vmul.f32 %v1048, %v1072
      %v1086 = vmul.f32 %v1049, %v1072
      %v1087 = vmul.f32 %v1050, %v1072
      %v1088 = vmul.f32 %v1051, %v1072
      %v1089 = vmul.f32 %v1052, %v1072
      %v1090 = vmul.f32 %v1053, %v1072
      %v1091 = vmul.f32 %v1054, %v1072
      %v1092 = vmul.f32 %v1055, %v1072
      %v1093 = vmul.f32 %v1056, %v1072
      %v1094 = vmul.f32 %v1057, %v1072
      %v1095 = vmul.f32 %v1058, %v1072
      %v1096 = vmul.f32 %v1059, %v1072
      %v1097 = vmul.f32 %v1060, %v1072
      %v1098 = vmul.f32 %v1061, %v1072
      %v1099 = vmul.f32 %v1062, %v1072
      %v1100 = vmul.f32 %v1063, %v1072
      %v1101 = vmul.f32 %v1064, %v1072
      %v1102 = vmul.f32 %v1065, %v1072
      %v1103 = vmul.f32 %v1066, %v1072
      %v1104 = vmul.f32 %v1067, %v1072
      %v1105 = vadd.f32 %v1004, %v1073
      %v1106 = vadd.f32 %v1005, %v1074
      %v1107 = vadd.f32 %v1006, %v1075
      %v1108 = vadd.f32 %v1007, %v1076
      %v1109 = vadd.f32 %v1008, %v1077
      %v1110 = vadd.f32 %v1009, %v1078
      %v1111 = vadd.f32 %v1010, %v1079
      %v1112 = vadd.f32 %v1011, %v1080
      %v1113 = vadd.f32 %v1012, %v1081
      %v1114 = vadd.f32 %v1013, %v1082
      %v1115 = vadd.f32 %v1014, %v1083
      %v1116 = vadd.f32 %v1015, %v1084
      %v1117 = vadd.f32 %v1016, %v1085
      %v1118 = vadd.f32 %v1017, %v1086
      %v1119 = vadd.f32 %v1018, %v1087
      %v1120 = vadd.f32 %v1019, %v1088
      %v1121 = vadd.f32 %v1020, %v1089
      %v1122 = vadd.f32 %v1021, %v1090
      %v1123 = vadd.f32 %v1022, %v1091
      %v1124 = vadd.f32 %v1023, %v1092
      %v1125 = vadd.f32 %v1024, %v1093
      %v1126 = vadd.f32 %v1025, %v1094
      %v1127 = vadd.f32 %v1026, %v1095
      %v1128 = vadd.f32 %v1027, %v1096
      %v1129 = vadd.f32 %v1028, %v1097
      %v1130 = vadd.f32 %v1029, %v1098
      %v1131 = vadd.f32 %v1030, %v1099
      %v1132 = vadd.f32 %v1031, %v1100
      %v1133 = vadd.f32 %v1032, %v1101
      %v1134 = vadd.f32 %v1033, %v1102
      %v1135 = vadd.f32 %v1034, %v1103
      %v1136 = vadd.f32 %v1035, %v1104
      %v1137 = vld [vmem:[%s2] sm:$0x1]
      %v1139 = vlaneseq
      %v1140 = vshrl.u32 %v1139, 7
      %v1141 = vsub.s32 0, %v1140
      %v1142 = vrot.slane %v1137, %v1141
      %v1144 = vadd.f32 %v1105, %v1142
      %v1145 = vadd.f32 %v1106, %v1142
      %v1146 = vadd.f32 %v1107, %v1142
      %v1147 = vadd.f32 %v1108, %v1142
      %v1148 = vadd.f32 %v1109, %v1142
      %v1149 = vadd.f32 %v1110, %v1142
      %v1150 = vadd.f32 %v1111, %v1142
      %v1151 = vadd.f32 %v1112, %v1142
      %v1152 = vadd.f32 %v1113, %v1142
      %v1153 = vadd.f32 %v1114, %v1142
      %v1154 = vadd.f32 %v1115, %v1142
      %v1155 = vadd.f32 %v1116, %v1142
      %v1156 = vadd.f32 %v1117, %v1142
      %v1157 = vadd.f32 %v1118, %v1142
      %v1158 = vadd.f32 %v1119, %v1142
      %v1159 = vadd.f32 %v1120, %v1142
      %v1160 = vadd.f32 %v1121, %v1142
      %v1161 = vadd.f32 %v1122, %v1142
      %v1162 = vadd.f32 %v1123, %v1142
      %v1163 = vadd.f32 %v1124, %v1142
      %v1164 = vadd.f32 %v1125, %v1142
      %v1165 = vadd.f32 %v1126, %v1142
      %v1166 = vadd.f32 %v1127, %v1142
      %v1167 = vadd.f32 %v1128, %v1142
      %v1168 = vadd.f32 %v1129, %v1142
      %v1169 = vadd.f32 %v1130, %v1142
      %v1170 = vadd.f32 %v1131, %v1142
      %v1171 = vadd.f32 %v1132, %v1142
      %v1172 = vadd.f32 %v1133, %v1142
      %v1173 = vadd.f32 %v1134, %v1142
      %v1174 = vadd.f32 %v1135, %v1142
      %v1175 = vadd.f32 %v1136, %v1142
      %v1176 = vpack.c.bf16 %v1145, %v1144
      %v1177 = vpack.c.bf16 %v1147, %v1146
      %v1178 = vpack.c.bf16 %v1149, %v1148
      %v1179 = vpack.c.bf16 %v1151, %v1150
      %v1180 = vpack.c.bf16 %v1153, %v1152
      %v1181 = vpack.c.bf16 %v1155, %v1154
      %v1182 = vpack.c.bf16 %v1157, %v1156
      %v1183 = vpack.c.bf16 %v1159, %v1158
      %v1184 = vpack.c.bf16 %v1161, %v1160
      %v1185 = vpack.c.bf16 %v1163, %v1162
      %v1186 = vpack.c.bf16 %v1165, %v1164
      %v1187 = vpack.c.bf16 %v1167, %v1166
      %v1188 = vpack.c.bf16 %v1169, %v1168
      %v1189 = vpack.c.bf16 %v1171, %v1170
      %v1190 = vpack.c.bf16 %v1173, %v1172
      %v1191 = vpack.c.bf16 %v1175, %v1174
      %v1192 = vld [vmem:[%s3] sm:$0xf]
      %v1193 = vld [vmem:[%s3 + $0x4] sm:$0xf]
      %v1194 = vld [vmem:[%s3 + $0x8] sm:$0xf]
      %v1195 = vld [vmem:[%s3 + $0xc] sm:$0xf]
      %v1196 = vld [vmem:[%s3 + $0x10] sm:$0xf]
      %v1197 = vld [vmem:[%s3 + $0x14] sm:$0xf]
      %v1198 = vld [vmem:[%s3 + $0x18] sm:$0xf]
      %v1199 = vld [vmem:[%s3 + $0x1c] sm:$0xf]
      %v1200 = vld [vmem:[%s3 + $0x20] sm:$0xf]
      %v1201 = vld [vmem:[%s3 + $0x24] sm:$0xf]
      %v1202 = vld [vmem:[%s3 + $0x28] sm:$0xf]
      %v1203 = vld [vmem:[%s3 + $0x2c] sm:$0xf]
      %v1204 = vld [vmem:[%s3 + $0x30] sm:$0xf]
      %v1205 = vld [vmem:[%s3 + $0x34] sm:$0xf]
      %v1206 = vld [vmem:[%s3 + $0x38] sm:$0xf]
      %v1207 = vld [vmem:[%s3 + $0x3c] sm:$0xf]
      %v1208 = vld [vmem:[%s4] sm:$0x1]
      %v1210 = vlaneseq
      %v1211 = vshrl.u32 %v1210, 7
      %v1212 = vsub.s32 0, %v1211
      %v1213 = vrot.slane %v1208, %v1212
      %v1231 = vunpack.c.l.b16 %v1192
      %v1232 = vunpack.c.l.b16 %v1193
      %v1233 = vunpack.c.l.b16 %v1194
      %v1234 = vunpack.c.l.b16 %v1195
      %v1235 = vunpack.c.l.b16 %v1196
      %v1236 = vunpack.c.l.b16 %v1197
      %v1237 = vunpack.c.l.b16 %v1198
      %v1238 = vunpack.c.l.b16 %v1199
      %v1239 = vunpack.c.l.b16 %v1200
      %v1240 = vunpack.c.l.b16 %v1201
      %v1241 = vunpack.c.l.b16 %v1202
      %v1242 = vunpack.c.l.b16 %v1203
      %v1243 = vunpack.c.l.b16 %v1204
      %v1244 = vunpack.c.l.b16 %v1205
      %v1245 = vunpack.c.l.b16 %v1206
      %v1246 = vunpack.c.l.b16 %v1207
      %v1247 = vpack.c.b16 %v1232, %v1231
      %v1248 = vpack.c.b16 %v1234, %v1233
      %v1249 = vpack.c.b16 %v1236, %v1235
      %v1250 = vpack.c.b16 %v1238, %v1237
      %v1251 = vpack.c.b16 %v1240, %v1239
      %v1252 = vpack.c.b16 %v1242, %v1241
      %v1253 = vpack.c.b16 %v1244, %v1243
      %v1254 = vpack.c.b16 %v1246, %v1245
      %1263 = vmatprep.subr.bf16.mxu0 0
      %1264 = vmatpush1.bf16.msra.mxu0 %v1247
      %1265 = vmatprep.subr.bf16.mxu0 0
      %1266 = vmatpush1.bf16.msra.mxu0 %v1248
      %1267 = vmatprep.subr.bf16.mxu0 0
      %1268 = vmatpush1.bf16.msra.mxu0 %v1249
      %1269 = vmatprep.subr.bf16.mxu0 0
      %1270 = vmatpush1.bf16.msra.mxu0 %v1250
      %1271 = vmatprep.subr.bf16.mxu0 0
      %1272 = vmatpush1.bf16.msra.mxu0 %v1251
      %1273 = vmatprep.subr.bf16.mxu0 0
      %1274 = vmatpush1.bf16.msra.mxu0 %v1252
      %1275 = vmatprep.subr.bf16.mxu0 0
      %1276 = vmatpush1.bf16.msra.mxu0 %v1253
      %1277 = vmatprep.subr.bf16.mxu0 0
      %1278 = vmatpush1.bf16.msra.mxu0 %v1254
      %1279 = vmatprep.subr.bf16.mxu0 0
      %1280 = vmatpush1.bf16.msra.mxu0 0
      %1281 = vmatprep.subr.bf16.mxu0 0
      %1282 = vmatpush1.bf16.msra.mxu0 0
      %1283 = vmatprep.subr.bf16.mxu0 0
      %1284 = vmatpush1.bf16.msra.mxu0 0
      %1285 = vmatprep.subr.bf16.mxu0 0
      %1286 = vmatpush1.bf16.msra.mxu0 0
      %1287 = vmatprep.subr.bf16.mxu0 0
      %1288 = vmatpush1.bf16.msra.mxu0 0
      %1289 = vmatprep.subr.bf16.mxu0 0
      %1290 = vmatpush1.bf16.msra.mxu0 0
      %1291 = vmatprep.subr.bf16.mxu0 0
      %1292 = vmatpush1.bf16.msra.mxu0 0
      %1293 = vmatprep.subr.bf16.mxu0 0
      %1294 = vmatpush1.bf16.msra.mxu0 0
      %1295 = vmatprep.mubr.bf16.mxu0 0
      %1296 = vmatmul.mubr.bf16.gmra.mrb[0].mxu0 %v1176
      %v1297 = vpop.f32.mrb[0].mxu0
      %v1298 = vadd.f32 %v1213, %v1297
      %v1299 = vpop.f32.mrb[0].mxu0
      %v1300 = vpop.f32.mrb[0].mxu0
      %v1301 = vadd.f32 %v1213, %v1300
      %v1302 = vpop.f32.mrb[0].mxu0
      %1303 = vmatprep.mubr.bf16.mxu0 0
      %1304 = vmatmul.mubr.bf16.gmra.mrb[0].mxu0 %v1177
      %v1305 = vpop.f32.mrb[0].mxu0
      %v1306 = vadd.f32 %v1213, %v1305
      %v1307 = vpop.f32.mrb[0].mxu0
      %v1308 = vpop.f32.mrb[0].mxu0
      %v1309 = vadd.f32 %v1213, %v1308
      %v1310 = vpop.f32.mrb[0].mxu0
      %1311 = vmatprep.mubr.bf16.mxu0 0
      %1312 = vmatmul.mubr.bf16.gmra.mrb[0].mxu0 %v1178
      %v1313 = vpop.f32.mrb[0].mxu0
      %v1314 = vadd.f32 %v1213, %v1313
      %v1315 = vpop.f32.mrb[0].mxu0
      %v1316 = vpop.f32.mrb[0].mxu0
      %v1317 = vadd.f32 %v1213, %v1316
      %v1318 = vpop.f32.mrb[0].mxu0
      %1319 = vmatprep.mubr.bf16.mxu0 0
      %1320 = vmatmul.mubr.bf16.gmra.mrb[0].mxu0 %v1179
      %v1321 = vpop.f32.mrb[0].mxu0
      %v1322 = vadd.f32 %v1213, %v1321
      %v1323 = vpop.f32.mrb[0].mxu0
      %v1324 = vpop.f32.mrb[0].mxu0
      %v1325 = vadd.f32 %v1213, %v1324
      %v1326 = vpop.f32.mrb[0].mxu0
      %1327 = vmatprep.mubr.bf16.mxu0 0
      %1328 = vmatmul.mubr.bf16.gmra.mrb[0].mxu0 %v1180
      %v1329 = vpop.f32.mrb[0].mxu0
      %v1330 = vadd.f32 %v1213, %v1329
      %v1331 = vpop.f32.mrb[0].mxu0
      %v1332 = vpop.f32.mrb[0].mxu0
      %v1333 = vadd.f32 %v1213, %v1332
      %v1334 = vpop.f32.mrb[0].mxu0
      %1335 = vmatprep.mubr.bf16.mxu0 0
      %1336 = vmatmul.mubr.bf16.gmra.mrb[0].mxu0 %v1181
      %v1337 = vpop.f32.mrb[0].mxu0
      %v1338 = vadd.f32 %v1213, %v1337
      %v1339 = vpop.f32.mrb[0].mxu0
      %v1340 = vpop.f32.mrb[0].mxu0
      %v1341 = vadd.f32 %v1213, %v1340
      %v1342 = vpop.f32.mrb[0].mxu0
      %1343 = vmatprep.mubr.bf16.mxu0 0
      %1344 = vmatmul.mubr.bf16.gmra.mrb[0].mxu0 %v1182
      %v1345 = vpop.f32.mrb[0].mxu0
      %v1346 = vadd.f32 %v1213, %v1345
      %v1347 = vpop.f32.mrb[0].mxu0
      %v1348 = vpop.f32.mrb[0].mxu0
      %v1349 = vadd.f32 %v1213, %v1348
      %v1350 = vpop.f32.mrb[0].mxu0
      %1351 = vmatprep.mubr.bf16.mxu0 0
      %1352 = vmatmul.mubr.bf16.gmra.mrb[0].mxu0 %v1183
      %v1353 = vpop.f32.mrb[0].mxu0
      %v1354 = vadd.f32 %v1213, %v1353
      %v1355 = vpop.f32.mrb[0].mxu0
      %v1356 = vpop.f32.mrb[0].mxu0
      %v1357 = vadd.f32 %v1213, %v1356
      %v1358 = vpop.f32.mrb[0].mxu0
      %1359 = vmatprep.mubr.bf16.mxu0 0
      %1360 = vmatmul.mubr.bf16.gmra.mrb[0].mxu0 %v1184
      %v1361 = vpop.f32.mrb[0].mxu0
      %v1362 = vadd.f32 %v1213, %v1361
      %v1363 = vpop.f32.mrb[0].mxu0
      %v1364 = vpop.f32.mrb[0].mxu0
      %v1365 = vadd.f32 %v1213, %v1364
      %v1366 = vpop.f32.mrb[0].mxu0
      %1367 = vmatprep.mubr.bf16.mxu0 0
      %1368 = vmatmul.mubr.bf16.gmra.mrb[0].mxu0 %v1185
      %v1369 = vpop.f32.mrb[0].mxu0
      %v1370 = vadd.f32 %v1213, %v1369
      %v1371 = vpop.f32.mrb[0].mxu0
      %v1372 = vpop.f32.mrb[0].mxu0
      %v1373 = vadd.f32 %v1213, %v1372
      %v1374 = vpop.f32.mrb[0].mxu0
      %1375 = vmatprep.mubr.bf16.mxu0 0
      %1376 = vmatmul.mubr.bf16.gmra.mrb[0].mxu0 %v1186
      %v1377 = vpop.f32.mrb[0].mxu0
      %v1378 = vadd.f32 %v1213, %v1377
      %v1379 = vpop.f32.mrb[0].mxu0
      %v1380 = vpop.f32.mrb[0].mxu0
      %v1381 = vadd.f32 %v1213, %v1380
      %v1382 = vpop.f32.mrb[0].mxu0
      %1383 = vmatprep.mubr.bf16.mxu0 0
      %1384 = vmatmul.mubr.bf16.gmra.mrb[0].mxu0 %v1187
      %v1385 = vpop.f32.mrb[0].mxu0
      %v1386 = vadd.f32 %v1213, %v1385
      %v1387 = vpop.f32.mrb[0].mxu0
      %v1388 = vpop.f32.mrb[0].mxu0
      %v1389 = vadd.f32 %v1213, %v1388
      %v1390 = vpop.f32.mrb[0].mxu0
      %1391 = vmatprep.mubr.bf16.mxu0 0
      %1392 = vmatmul.mubr.bf16.gmra.mrb[0].mxu0 %v1188
      %v1393 = vpop.f32.mrb[0].mxu0
      %v1394 = vadd.f32 %v1213, %v1393
      %v1395 = vpop.f32.mrb[0].mxu0
      %v1396 = vpop.f32.mrb[0].mxu0
      %v1397 = vadd.f32 %v1213, %v1396
      %v1398 = vpop.f32.mrb[0].mxu0
      %1399 = vmatprep.mubr.bf16.mxu0 0
      %1400 = vmatmul.mubr.bf16.gmra.mrb[0].mxu0 %v1189
      %v1401 = vpop.f32.mrb[0].mxu0
      %v1402 = vadd.f32 %v1213, %v1401
      %v1403 = vpop.f32.mrb[0].mxu0
      %v1404 = vpop.f32.mrb[0].mxu0
      %v1405 = vadd.f32 %v1213, %v1404
      %v1406 = vpop.f32.mrb[0].mxu0
      %1407 = vmatprep.mubr.bf16.mxu0 0
      %1408 = vmatmul.mubr.bf16.gmra.mrb[0].mxu0 %v1190
      %v1409 = vpop.f32.mrb[0].mxu0
      %v1410 = vadd.f32 %v1213, %v1409
      %v1411 = vpop.f32.mrb[0].mxu0
      %v1412 = vpop.f32.mrb[0].mxu0
      %v1413 = vadd.f32 %v1213, %v1412
      %v1414 = vpop.f32.mrb[0].mxu0
      %1415 = vmatprep.mubr.bf16.mxu0 0
      %1416 = vmatmul.mubr.bf16.gmra.mrb[0].mxu0 %v1191
      %v1417 = vpop.f32.mrb[0].mxu0
      %v1418 = vadd.f32 %v1213, %v1417
      %v1419 = vpop.f32.mrb[0].mxu0
      %v1420 = vpop.f32.mrb[0].mxu0
      %v1421 = vadd.f32 %v1213, %v1420
      %v1422 = vpop.f32.mrb[0].mxu0
      %1423 = vdwg.mxu0
      %1424 = vst [vmem:[%s224] sm:$0xff] %v1298
      %1425 = vst [vmem:[%s224 + $0x8] sm:$0xff] %v1301
      %1426 = vst [vmem:[%s224 + $0x10] sm:$0xff] %v1306
      %1427 = vst [vmem:[%s224 + $0x18] sm:$0xff] %v1309
      %1428 = vst [vmem:[%s224 + $0x20] sm:$0xff] %v1314
      %1429 = vst [vmem:[%s224 + $0x28] sm:$0xff] %v1317
      %1430 = vst [vmem:[%s224 + $0x30] sm:$0xff] %v1322
      %1431 = vst [vmem:[%s224 + $0x38] sm:$0xff] %v1325
      %1432 = vst [vmem:[%s224 + $0x40] sm:$0xff] %v1330
      %1433 = vst [vmem:[%s224 + $0x48] sm:$0xff] %v1333
      %1434 = vst [vmem:[%s224 + $0x50] sm:$0xff] %v1338
      %1435 = vst [vmem:[%s224 + $0x58] sm:$0xff] %v1341
      %1436 = vst [vmem:[%s224 + $0x60] sm:$0xff] %v1346
      %1437 = vst [vmem:[%s224 + $0x68] sm:$0xff] %v1349
      %1438 = vst [vmem:[%s224 + $0x70] sm:$0xff] %v1354
      %1439 = vst [vmem:[%s224 + $0x78] sm:$0xff] %v1357
      %1440 = vst [vmem:[%s224 + $0x80] sm:$0xff] %v1362
      %1441 = vst [vmem:[%s224 + $0x88] sm:$0xff] %v1365
      %1442 = vst [vmem:[%s224 + $0x90] sm:$0xff] %v1370
      %1443 = vst [vmem:[%s224 + $0x98] sm:$0xff] %v1373
      %1444 = vst [vmem:[%s224 + $0xa0] sm:$0xff] %v1378
      %1445 = vst [vmem:[%s224 + $0xa8] sm:$0xff] %v1381
      %1446 = vst [vmem:[%s224 + $0xb0] sm:$0xff] %v1386
      %1447 = vst [vmem:[%s224 + $0xb8] sm:$0xff] %v1389
      %1448 = vst [vmem:[%s224 + $0xc0] sm:$0xff] %v1394
      %1449 = vst [vmem:[%s224 + $0xc8] sm:$0xff] %v1397
      %1450 = vst [vmem:[%s224 + $0xd0] sm:$0xff] %v1402
      %1451 = vst [vmem:[%s224 + $0xd8] sm:$0xff] %v1405
      %1452 = vst [vmem:[%s224 + $0xe0] sm:$0xff] %v1410
      %1453 = vst [vmem:[%s224 + $0xe8] sm:$0xff] %v1413
      %1454 = vst [vmem:[%s224 + $0xf0] sm:$0xff] %v1418
      %1455 = vst [vmem:[%s224 + $0xf8] sm:$0xff] %v1421
      %p1456 = scmp.lt.s32.totalorder %s16, 1
      %s1457 = scalar_select %p1456, %s16, 1
      %s1458 = smul.addr %s1457, 32
      %s1459 = smul.addr %s1458, 8
      %s1460 = scalar_lea.vmem %s5, %s1459
      // Predicated region
      $region41: #{atrous_separable_conv.1} parent=39 // pred_check
        %p1461 = pneg %p144
      $region42: #{atrous_separable_conv.1} parent=39 // pred_check_branch
        %1463 = sbr.rel (%p1461) target = $region44
      $region43: #{atrous_separable_conv.1} parent=39 // pred_region
        _
      $region44: #{atrous_separable_conv.1} parent=39 // pred_fallthru
        _
    $region40: #{atrous_separable_conv.1} parent=5 // pred_fallthru
      _
    %p1464 = scmp.le.s32.totalorder 2, %s11
    // Predicated region
    $region45: #{atrous_separable_conv.1} parent=5 // pred_check
      %p1465 = pneg %p1464
    $region46: #{atrous_separable_conv.1} parent=5 // pred_check_branch
      %1467 = sbr.rel (%p1465) target = $region48
    $region47: #{atrous_separable_conv.1} parent=5 // pred_region
      %s1468 = ssub.s32 %s11, 2
      // Predicated region
      $region49: #{atrous_separable_conv.1} parent=47 // pred_check
        %p1469 = pneg %p150
      $region50: #{atrous_separable_conv.1} parent=47 // pred_check_branch
        %1471 = sbr.rel (%p1469) target = $region52
      $region51: #{atrous_separable_conv.1} parent=47 // pred_region
        %p1472 = scmp.lt.s32.totalorder %s17, 1
        %s1473 = scalar_select %p1472, %s17, 1
        %s1474 = smul.addr %s1473, 32
        %s1475 = smul.addr %s1474, 8
        %s1476 = scalar_lea.vmem %s5, %s1475
      $region52: #{atrous_separable_conv.1} parent=47 // pred_fallthru
        _
    $region48: #{atrous_separable_conv.1} parent=5 // pred_fallthru
      _
  $region6: #{atrous_separable_conv.1} parent=0 // loop_footer
    %s15 = sadd.s32 1, %s11
  $region7: #{atrous_separable_conv.1} parent=0 // loop_footer_branch
    %10 = sbr.rel target = $region3
  $region8: #{atrous_separable_conv.1} parent=0 // loop_exit
    _

</llo_original>
